<compile_context>
chip_gen: v7x
topology: tpu7x:2x2x1
jax: 0.10.0
libtpu: 0.0.40
codegen_flags: <defaults>
</compile_context>

<pallas_src>
import functools
import math

import jax
import jax.numpy as jnp
from jax import lax
from jax.experimental import pallas as pl
from jax.experimental.pallas import tpu as pltpu


def mha_kernel(q_ref, k_ref, v_ref,
               wq_ref, wk_ref, wv_ref, wo_ref,
               bq_ref, bk_ref, bv_ref, bo_ref,
               o_ref, *, num_heads, d_k):
    tq = q_ref.shape[1]
    d_model = q_ref.shape[2]

    # Activations for this (batch, q-tile) step; cast once to bf16 for the MXU.
    xq = q_ref[0].astype(jnp.bfloat16)          # (tq, D)
    xk = k_ref[0].astype(jnp.bfloat16)          # (S,  D)
    xv = v_ref[0].astype(jnp.bfloat16)          # (S,  D)

    # Q / K / V projections (bf16 operands, f32 accumulation). The 1/sqrt(d_k)
    # scale is already folded into wq/bq on the host.
    yq = (jnp.dot(xq, wq_ref[...], preferred_element_type=jnp.float32)
          + bq_ref[...]).astype(jnp.bfloat16)   # (tq, D)
    yk = (jnp.dot(xk, wk_ref[...], preferred_element_type=jnp.float32)
          + bk_ref[...]).astype(jnp.bfloat16)   # (S, D)
    yv = (jnp.dot(xv, wv_ref[...], preferred_element_type=jnp.float32)
          + bv_ref[...]).astype(jnp.bfloat16)   # (S, D)

    # Output accumulator starts from the output-projection bias (hoisted
    # broadcast, reused across heads).
    out = jnp.broadcast_to(bo_ref[...].astype(jnp.float32), (tq, d_model))

    # scores_h = q_h @ k_h^T without materializing a transpose: contract d_k.
    dn_qk = (((1,), (1,)), ((), ()))

    for h in range(num_heads):                  # static unroll; liveness bounded
        lo = h * d_k
        q_h = yq[:, lo:lo + d_k]                # (tq, d_k) bf16
        k_h = yk[:, lo:lo + d_k]                # (S,  d_k) bf16
        v_h = yv[:, lo:lo + d_k]                # (S,  d_k) bf16

        s = lax.dot_general(q_h, k_h, dn_qk,
                            preferred_element_type=jnp.float32)   # (tq, S)

        # Numerically-stable softmax; divide -> EUP reciprocal (approx).
        m = jnp.max(s, axis=-1, keepdims=True)
        e = jnp.exp(s - m)                      # f32 exp (v5e has no bf16 EUP)
        p = (e * pl.reciprocal(jnp.sum(e, axis=-1, keepdims=True), approx=True)
             ).astype(jnp.bfloat16)

        ctx = jnp.dot(p, v_h, preferred_element_type=jnp.float32)  # (tq, d_k)

        # Accumulate the output projection per head: no concat, no (S, D)
        # context intermediate; scores/e/p/ctx die at the end of each iter.
        out = out + jnp.dot(ctx.astype(jnp.bfloat16),
                            wo_ref[lo:lo + d_k, :],
                            preferred_element_type=jnp.float32)    # (tq, D)

    # TODO(synk): attention mask and attention-weight dropout not implemented
    # (the reference forward's mask/dropout paths are unreachable/buggy; this
    # matches eval, Mask=None semantics).
    o_ref[0] = out.astype(o_ref.dtype)


def multi_head_attention(query, key, value, params, *, num_heads):
    """query/key/value: (B, S, D). params: wq/wk/wv/wo (D,D), bq/bk/bv/bo (D,)."""
    B, S, D = query.shape
    assert D % num_heads == 0
    d_k = D // num_heads
    scale = 1.0 / math.sqrt(d_k)

    # Host-side one-time weight prep: fold the q scale, cast weights to bf16
    # (what the MXU consumes; halves weight DMA + VMEM), keep biases in f32.
    wq = (params["wq"] * scale).astype(jnp.bfloat16)
    wk = params["wk"].astype(jnp.bfloat16)
    wv = params["wv"].astype(jnp.bfloat16)
    wo = params["wo"].astype(jnp.bfloat16)
    bq = (params["bq"] * scale).reshape(1, D).astype(jnp.float32)
    bk = params["bk"].reshape(1, D).astype(jnp.float32)
    bv = params["bv"].reshape(1, D).astype(jnp.float32)
    bo = params["bo"].reshape(1, D).astype(jnp.float32)

    # Query tiling: up to 128 query rows per step (lane-dense D stays whole).
    tq = 128 if S % 128 == 0 else S
    n_q = S // tq
    # TODO(synk): production shapes (S >= 2k, D >= 1k) need flash-style KV
    # tiling (online softmax over an "arbitrary" KV grid axis) to stay inside
    # v7x's 64 MiB VMEM; at the small demo shape full-KV blocks are fine.

    q_spec = pl.BlockSpec((1, tq, D), lambda b, qi: (b, qi, 0))
    kv_spec = pl.BlockSpec((1, S, D), lambda b, qi: (b, 0, 0))
    o_spec = pl.BlockSpec((1, tq, D), lambda b, qi: (b, qi, 0))
    # Constant index_map -> weights/biases stay VMEM-resident across the grid;
    # single-buffered since the block never changes (default double-buffering
    # would waste 4*D*D*2 bytes of VMEM).
    w_spec = pl.BlockSpec((D, D), lambda b, qi: (0, 0),
                          pipeline_mode=pl.Buffered(1))
    b_spec = pl.BlockSpec((1, D), lambda b, qi: (0, 0),
                          pipeline_mode=pl.Buffered(1))

    act_bytes = query.dtype.itemsize
    flops = 8 * B * S * D * D + 4 * B * S * S * D
    transcendentals = B * num_heads * S * S
    bytes_accessed = 4 * B * S * D * act_bytes + 4 * D * D * 2 + 4 * D * 4

    kernel = functools.partial(mha_kernel, num_heads=num_heads, d_k=d_k)

    return pl.pallas_call(
        kernel,
        out_shape=jax.ShapeDtypeStruct((B, S, D), query.dtype),
        grid_spec=pltpu.PrefetchScalarGridSpec(
            num_scalar_prefetch=0,
            grid=(B, n_q),
            in_specs=[q_spec, kv_spec, kv_spec,
                      w_spec, w_spec, w_spec, w_spec,
                      b_spec, b_spec, b_spec, b_spec],
            out_specs=o_spec,
        ),
        # NOTE: when sizing production tiles on v5e/v6e, also raise
        # vmem_limit_bytes (scoped default is 16/32 MiB of 128 MiB physical);
        # keep the default on v7x (64 MiB physical).
        compiler_params=pltpu.CompilerParams(
            dimension_semantics=("parallel", "parallel")),
        cost_estimate=pl.CostEstimate(
            flops=flops,
            transcendentals=transcendentals,
            bytes_accessed=bytes_accessed),
    )(query, key, value, wq, wk, wv, wo, bq, bk, bv, bo)


def reference_mha(query, key, value, params, *, num_heads):
    """Pure-JAX f32 reference matching the PyTorch forward (eval, no mask)."""
    B, S, D = query.shape
    d_k = D // num_heads

    def proj(x, w, b):
        return x.astype(jnp.float32) @ w + b

    def split(y):
        return y.reshape(B, S, num_heads, d_k).transpose(0, 2, 1, 3)

    q = split(proj(query, params["wq"], params["bq"]))
    k = split(proj(key, params["wk"], params["bk"]))
    v = split(proj(value, params["wv"], params["bv"]))

    scores = jnp.einsum("bhqd,bhkd->bhqk", q, k) / math.sqrt(d_k)
    p = jax.nn.softmax(scores, axis=-1)
    ctx = jnp.einsum("bhqk,bhkd->bhqd", p, v)
    ctx = ctx.transpose(0, 2, 1, 3).reshape(B, S, D)
    return (ctx @ params["wo"] + params["bo"]).astype(query.dtype)


if __name__ == "__main__":
    B, S, D, H = 2, 8, 32, 4
    key0 = jax.random.PRNGKey(0)
    kq, kk, kv, kwq, kwk, kwv, kwo, kb = jax.random.split(key0, 8)

    query = jax.random.normal(kq, (B, S, D), dtype=jnp.float32)
    key_in = jax.random.normal(kk, (B, S, D), dtype=jnp.float32)
    value = jax.random.normal(kv, (B, S, D), dtype=jnp.float32)

    wscale = 1.0 / math.sqrt(D)
    biases = jax.random.normal(kb, (4, D), dtype=jnp.float32) * 0.1
    params = {
        "wq": jax.random.normal(kwq, (D, D), dtype=jnp.float32) * wscale,
        "wk": jax.random.normal(kwk, (D, D), dtype=jnp.float32) * wscale,
        "wv": jax.random.normal(kwv, (D, D), dtype=jnp.float32) * wscale,
        "wo": jax.random.normal(kwo, (D, D), dtype=jnp.float32) * wscale,
        "bq": biases[0], "bk": biases[1], "bv": biases[2], "bo": biases[3],
    }

    out = multi_head_attention(query, key_in, value, params, num_heads=H)
    jax.block_until_ready(out)

    ref = reference_mha(query, key_in, value, params, num_heads=H)
    # Tolerance accounts for bf16 MXU operands + approx reciprocal vs f32 ref.
    assert jnp.allclose(out, ref, atol=5e-2, rtol=5e-2), (
        f"mismatch vs reference: max abs err {jnp.max(jnp.abs(out - ref))}")

    print("KERNEL_OK")
</pallas_src>

<mosaic_0001>
module attributes {stable_mosaic.version = 11 : i64} {
  func.func @mha_kernel(%arg0: i32, %arg1: i32, %arg2: memref<1x8x32xf32, #tpu.memory_space<vmem>>, %arg3: memref<1x8x32xf32, #tpu.memory_space<vmem>>, %arg4: memref<1x8x32xf32, #tpu.memory_space<vmem>>, %arg5: memref<32x32xbf16, #tpu.memory_space<vmem>>, %arg6: memref<32x32xbf16, #tpu.memory_space<vmem>>, %arg7: memref<32x32xbf16, #tpu.memory_space<vmem>>, %arg8: memref<32x32xbf16, #tpu.memory_space<vmem>>, %arg9: memref<1x32xf32, #tpu.memory_space<vmem>>, %arg10: memref<1x32xf32, #tpu.memory_space<vmem>>, %arg11: memref<1x32xf32, #tpu.memory_space<vmem>>, %arg12: memref<1x32xf32, #tpu.memory_space<vmem>>, %arg13: memref<1x8x32xf32, #tpu.memory_space<vmem>>) attributes {dimension_semantics = [#tpu.dimension_semantics<parallel>, #tpu.dimension_semantics<parallel>], iteration_bounds = array<i64: 2, 1>, scalar_prefetch = 0 : i64, scratch_operands = 0 : i64, tpu.core_type = #tpu.core_type<tc>, window_params = [{transform_indices = @transform_0, window_bounds = array<i64: 1, 8, 32>}, {transform_indices = @transform_1, window_bounds = array<i64: 1, 8, 32>}, {transform_indices = @transform_2, window_bounds = array<i64: 1, 8, 32>}, {pipeline_mode = #tpu.pipeline_mode<synchronous>, transform_indices = @transform_3, window_bounds = array<i64: 32, 32>}, {pipeline_mode = #tpu.pipeline_mode<synchronous>, transform_indices = @transform_4, window_bounds = array<i64: 32, 32>}, {pipeline_mode = #tpu.pipeline_mode<synchronous>, transform_indices = @transform_5, window_bounds = array<i64: 32, 32>}, {pipeline_mode = #tpu.pipeline_mode<synchronous>, transform_indices = @transform_6, window_bounds = array<i64: 32, 32>}, {pipeline_mode = #tpu.pipeline_mode<synchronous>, transform_indices = @transform_7, window_bounds = array<i64: 1, 32>}, {pipeline_mode = #tpu.pipeline_mode<synchronous>, transform_indices = @transform_8, window_bounds = array<i64: 1, 32>}, {pipeline_mode = #tpu.pipeline_mode<synchronous>, transform_indices = @transform_9, window_bounds = array<i64: 1, 32>}, {pipeline_mode = #tpu.pipeline_mode<synchronous>, transform_indices = @transform_10, window_bounds = array<i64: 1, 32>}, {transform_indices = @transform_11, window_bounds = array<i64: 1, 8, 32>}]} {
    %c0 = arith.constant 0 : index
    %c0_0 = arith.constant 0 : index
    %c0_1 = arith.constant 0 : index
    %0 = vector.load %arg2[%c0, %c0_0, %c0_1] : memref<1x8x32xf32, #tpu.memory_space<vmem>>, vector<1x8x32xf32>
    %1 = vector.shape_cast %0 : vector<1x8x32xf32> to vector<8x32xf32>
    %2 = arith.truncf %1 : vector<8x32xf32> to vector<8x32xbf16>
    %c0_2 = arith.constant 0 : index
    %c0_3 = arith.constant 0 : index
    %c0_4 = arith.constant 0 : index
    %3 = vector.load %arg3[%c0_2, %c0_3, %c0_4] : memref<1x8x32xf32, #tpu.memory_space<vmem>>, vector<1x8x32xf32>
    %4 = vector.shape_cast %3 : vector<1x8x32xf32> to vector<8x32xf32>
    %5 = arith.truncf %4 : vector<8x32xf32> to vector<8x32xbf16>
    %c0_5 = arith.constant 0 : index
    %c0_6 = arith.constant 0 : index
    %c0_7 = arith.constant 0 : index
    %6 = vector.load %arg4[%c0_5, %c0_6, %c0_7] : memref<1x8x32xf32, #tpu.memory_space<vmem>>, vector<1x8x32xf32>
    %7 = vector.shape_cast %6 : vector<1x8x32xf32> to vector<8x32xf32>
    %8 = arith.truncf %7 : vector<8x32xf32> to vector<8x32xbf16>
    %c0_8 = arith.constant 0 : index
    %c0_9 = arith.constant 0 : index
    %9 = vector.load %arg5[%c0_8, %c0_9] : memref<32x32xbf16, #tpu.memory_space<vmem>>, vector<32x32xbf16>
    %cst = arith.constant dense<0.000000e+00> : vector<8x32xf32>
    %10 = tpu.matmul %2, %9, %cst {dimension_numbers = #tpu.dot_dimension_numbers<[1], [0], [0], [1], [0, 0, 1, 1], [], []>} : vector<8x32xbf16>, vector<32x32xbf16>, vector<8x32xf32> -> vector<8x32xf32>
    %c0_10 = arith.constant 0 : index
    %c0_11 = arith.constant 0 : index
    %11 = vector.load %arg9[%c0_10, %c0_11] : memref<1x32xf32, #tpu.memory_space<vmem>>, vector<1x32xf32>
    %12 = vector.broadcast %11 : vector<1x32xf32> to vector<8x32xf32>
    %13 = arith.addf %10, %12 : vector<8x32xf32>
    %14 = arith.truncf %13 : vector<8x32xf32> to vector<8x32xbf16>
    %c0_12 = arith.constant 0 : index
    %c0_13 = arith.constant 0 : index
    %15 = vector.load %arg6[%c0_12, %c0_13] : memref<32x32xbf16, #tpu.memory_space<vmem>>, vector<32x32xbf16>
    %cst_14 = arith.constant dense<0.000000e+00> : vector<8x32xf32>
    %16 = tpu.matmul %5, %15, %cst_14 {dimension_numbers = #tpu.dot_dimension_numbers<[1], [0], [0], [1], [0, 0, 1, 1], [], []>} : vector<8x32xbf16>, vector<32x32xbf16>, vector<8x32xf32> -> vector<8x32xf32>
    %c0_15 = arith.constant 0 : index
    %c0_16 = arith.constant 0 : index
    %17 = vector.load %arg10[%c0_15, %c0_16] : memref<1x32xf32, #tpu.memory_space<vmem>>, vector<1x32xf32>
    %18 = vector.broadcast %17 : vector<1x32xf32> to vector<8x32xf32>
    %19 = arith.addf %16, %18 : vector<8x32xf32>
    %20 = arith.truncf %19 : vector<8x32xf32> to vector<8x32xbf16>
    %c0_17 = arith.constant 0 : index
    %c0_18 = arith.constant 0 : index
    %21 = vector.load %arg7[%c0_17, %c0_18] : memref<32x32xbf16, #tpu.memory_space<vmem>>, vector<32x32xbf16>
    %cst_19 = arith.constant dense<0.000000e+00> : vector<8x32xf32>
    %22 = tpu.matmul %8, %21, %cst_19 {dimension_numbers = #tpu.dot_dimension_numbers<[1], [0], [0], [1], [0, 0, 1, 1], [], []>} : vector<8x32xbf16>, vector<32x32xbf16>, vector<8x32xf32> -> vector<8x32xf32>
    %c0_20 = arith.constant 0 : index
    %c0_21 = arith.constant 0 : index
    %23 = vector.load %arg11[%c0_20, %c0_21] : memref<1x32xf32, #tpu.memory_space<vmem>>, vector<1x32xf32>
    %24 = vector.broadcast %23 : vector<1x32xf32> to vector<8x32xf32>
    %25 = arith.addf %22, %24 : vector<8x32xf32>
    %26 = arith.truncf %25 : vector<8x32xf32> to vector<8x32xbf16>
    %c0_22 = arith.constant 0 : index
    %c0_23 = arith.constant 0 : index
    %27 = vector.load %arg12[%c0_22, %c0_23] : memref<1x32xf32, #tpu.memory_space<vmem>>, vector<1x32xf32>
    %28 = vector.shape_cast %27 : vector<1x32xf32> to vector<1x32xf32>
    %29 = vector.broadcast %28 : vector<1x32xf32> to vector<8x32xf32>
    %30 = vector.extract_strided_slice %14 {offsets = [0, 0], sizes = [8, 8], strides = [1, 1]} : vector<8x32xbf16> to vector<8x8xbf16>
    %31 = vector.extract_strided_slice %20 {offsets = [0, 0], sizes = [8, 8], strides = [1, 1]} : vector<8x32xbf16> to vector<8x8xbf16>
    %32 = vector.extract_strided_slice %26 {offsets = [0, 0], sizes = [8, 8], strides = [1, 1]} : vector<8x32xbf16> to vector<8x8xbf16>
    %cst_24 = arith.constant dense<0.000000e+00> : vector<8x8xf32>
    %33 = tpu.matmul %30, %31, %cst_24 {dimension_numbers = #tpu.dot_dimension_numbers<[1], [1], [0], [0], [0, 0, 1, 0], [], []>} : vector<8x8xbf16>, vector<8x8xbf16>, vector<8x8xf32> -> vector<8x8xf32>
    %cst_25 = arith.constant dense<0xFF800000> : vector<8xf32>
    %34 = vector.multi_reduction <maximumf>, %33, %cst_25 [1] : vector<8x8xf32> to vector<8xf32>
    %35 = vector.shape_cast %34 : vector<8xf32> to vector<8x1xf32>
    %36 = vector.broadcast %35 : vector<8x1xf32> to vector<8x8xf32>
    %37 = arith.subf %33, %36 : vector<8x8xf32>
    %38 = math.exp %37 : vector<8x8xf32>
    %cst_26 = arith.constant dense<0.000000e+00> : vector<8xf32>
    %39 = vector.multi_reduction <add>, %38, %cst_26 [1] : vector<8x8xf32> to vector<8xf32>
    %40 = vector.shape_cast %39 : vector<8xf32> to vector<8x1xf32>
    %41 = tpu.reciprocal %40 {approx = true} : vector<8x1xf32> -> vector<8x1xf32>
    %42 = vector.broadcast %41 : vector<8x1xf32> to vector<8x8xf32>
    %43 = arith.mulf %38, %42 : vector<8x8xf32>
    %44 = arith.truncf %43 : vector<8x8xf32> to vector<8x8xbf16>
    %cst_27 = arith.constant dense<0.000000e+00> : vector<8x8xf32>
    %45 = tpu.matmul %44, %32, %cst_27 {dimension_numbers = #tpu.dot_dimension_numbers<[1], [0], [0], [1], [0, 0, 1, 1], [], []>} : vector<8x8xbf16>, vector<8x8xbf16>, vector<8x8xf32> -> vector<8x8xf32>
    %46 = arith.truncf %45 : vector<8x8xf32> to vector<8x8xbf16>
    %c0_28 = arith.constant 0 : index
    %c0_29 = arith.constant 0 : index
    %47 = vector.load %arg8[%c0_28, %c0_29] : memref<32x32xbf16, #tpu.memory_space<vmem>>, vector<8x32xbf16>
    %cst_30 = arith.constant dense<0.000000e+00> : vector<8x32xf32>
    %48 = tpu.matmul %46, %47, %cst_30 {dimension_numbers = #tpu.dot_dimension_numbers<[1], [0], [0], [1], [0, 0, 1, 1], [], []>} : vector<8x8xbf16>, vector<8x32xbf16>, vector<8x32xf32> -> vector<8x32xf32>
    %49 = arith.addf %29, %48 : vector<8x32xf32>
    %50 = vector.extract_strided_slice %14 {offsets = [0, 8], sizes = [8, 8], strides = [1, 1]} : vector<8x32xbf16> to vector<8x8xbf16>
    %51 = vector.extract_strided_slice %20 {offsets = [0, 8], sizes = [8, 8], strides = [1, 1]} : vector<8x32xbf16> to vector<8x8xbf16>
    %52 = vector.extract_strided_slice %26 {offsets = [0, 8], sizes = [8, 8], strides = [1, 1]} : vector<8x32xbf16> to vector<8x8xbf16>
    %cst_31 = arith.constant dense<0.000000e+00> : vector<8x8xf32>
    %53 = tpu.matmul %50, %51, %cst_31 {dimension_numbers = #tpu.dot_dimension_numbers<[1], [1], [0], [0], [0, 0, 1, 0], [], []>} : vector<8x8xbf16>, vector<8x8xbf16>, vector<8x8xf32> -> vector<8x8xf32>
    %cst_32 = arith.constant dense<0xFF800000> : vector<8xf32>
    %54 = vector.multi_reduction <maximumf>, %53, %cst_32 [1] : vector<8x8xf32> to vector<8xf32>
    %55 = vector.shape_cast %54 : vector<8xf32> to vector<8x1xf32>
    %56 = vector.broadcast %55 : vector<8x1xf32> to vector<8x8xf32>
    %57 = arith.subf %53, %56 : vector<8x8xf32>
    %58 = math.exp %57 : vector<8x8xf32>
    %cst_33 = arith.constant dense<0.000000e+00> : vector<8xf32>
    %59 = vector.multi_reduction <add>, %58, %cst_33 [1] : vector<8x8xf32> to vector<8xf32>
    %60 = vector.shape_cast %59 : vector<8xf32> to vector<8x1xf32>
    %61 = tpu.reciprocal %60 {approx = true} : vector<8x1xf32> -> vector<8x1xf32>
    %62 = vector.broadcast %61 : vector<8x1xf32> to vector<8x8xf32>
    %63 = arith.mulf %58, %62 : vector<8x8xf32>
    %64 = arith.truncf %63 : vector<8x8xf32> to vector<8x8xbf16>
    %cst_34 = arith.constant dense<0.000000e+00> : vector<8x8xf32>
    %65 = tpu.matmul %64, %52, %cst_34 {dimension_numbers = #tpu.dot_dimension_numbers<[1], [0], [0], [1], [0, 0, 1, 1], [], []>} : vector<8x8xbf16>, vector<8x8xbf16>, vector<8x8xf32> -> vector<8x8xf32>
    %66 = arith.truncf %65 : vector<8x8xf32> to vector<8x8xbf16>
    %c8 = arith.constant 8 : index
    %c0_35 = arith.constant 0 : index
    %67 = vector.load %arg8[%c8, %c0_35] : memref<32x32xbf16, #tpu.memory_space<vmem>>, vector<8x32xbf16>
    %cst_36 = arith.constant dense<0.000000e+00> : vector<8x32xf32>
    %68 = tpu.matmul %66, %67, %cst_36 {dimension_numbers = #tpu.dot_dimension_numbers<[1], [0], [0], [1], [0, 0, 1, 1], [], []>} : vector<8x8xbf16>, vector<8x32xbf16>, vector<8x32xf32> -> vector<8x32xf32>
    %69 = arith.addf %49, %68 : vector<8x32xf32>
    %70 = vector.extract_strided_slice %14 {offsets = [0, 16], sizes = [8, 8], strides = [1, 1]} : vector<8x32xbf16> to vector<8x8xbf16>
    %71 = vector.extract_strided_slice %20 {offsets = [0, 16], sizes = [8, 8], strides = [1, 1]} : vector<8x32xbf16> to vector<8x8xbf16>
    %72 = vector.extract_strided_slice %26 {offsets = [0, 16], sizes = [8, 8], strides = [1, 1]} : vector<8x32xbf16> to vector<8x8xbf16>
    %cst_37 = arith.constant dense<0.000000e+00> : vector<8x8xf32>
    %73 = tpu.matmul %70, %71, %cst_37 {dimension_numbers = #tpu.dot_dimension_numbers<[1], [1], [0], [0], [0, 0, 1, 0], [], []>} : vector<8x8xbf16>, vector<8x8xbf16>, vector<8x8xf32> -> vector<8x8xf32>
    %cst_38 = arith.constant dense<0xFF800000> : vector<8xf32>
    %74 = vector.multi_reduction <maximumf>, %73, %cst_38 [1] : vector<8x8xf32> to vector<8xf32>
    %75 = vector.shape_cast %74 : vector<8xf32> to vector<8x1xf32>
    %76 = vector.broadcast %75 : vector<8x1xf32> to vector<8x8xf32>
    %77 = arith.subf %73, %76 : vector<8x8xf32>
    %78 = math.exp %77 : vector<8x8xf32>
    %cst_39 = arith.constant dense<0.000000e+00> : vector<8xf32>
    %79 = vector.multi_reduction <add>, %78, %cst_39 [1] : vector<8x8xf32> to vector<8xf32>
    %80 = vector.shape_cast %79 : vector<8xf32> to vector<8x1xf32>
    %81 = tpu.reciprocal %80 {approx = true} : vector<8x1xf32> -> vector<8x1xf32>
    %82 = vector.broadcast %81 : vector<8x1xf32> to vector<8x8xf32>
    %83 = arith.mulf %78, %82 : vector<8x8xf32>
    %84 = arith.truncf %83 : vector<8x8xf32> to vector<8x8xbf16>
    %cst_40 = arith.constant dense<0.000000e+00> : vector<8x8xf32>
    %85 = tpu.matmul %84, %72, %cst_40 {dimension_numbers = #tpu.dot_dimension_numbers<[1], [0], [0], [1], [0, 0, 1, 1], [], []>} : vector<8x8xbf16>, vector<8x8xbf16>, vector<8x8xf32> -> vector<8x8xf32>
    %86 = arith.truncf %85 : vector<8x8xf32> to vector<8x8xbf16>
    %c16 = arith.constant 16 : index
    %c0_41 = arith.constant 0 : index
    %87 = vector.load %arg8[%c16, %c0_41] : memref<32x32xbf16, #tpu.memory_space<vmem>>, vector<8x32xbf16>
    %cst_42 = arith.constant dense<0.000000e+00> : vector<8x32xf32>
    %88 = tpu.matmul %86, %87, %cst_42 {dimension_numbers = #tpu.dot_dimension_numbers<[1], [0], [0], [1], [0, 0, 1, 1], [], []>} : vector<8x8xbf16>, vector<8x32xbf16>, vector<8x32xf32> -> vector<8x32xf32>
    %89 = arith.addf %69, %88 : vector<8x32xf32>
    %90 = vector.extract_strided_slice %14 {offsets = [0, 24], sizes = [8, 8], strides = [1, 1]} : vector<8x32xbf16> to vector<8x8xbf16>
    %91 = vector.extract_strided_slice %20 {offsets = [0, 24], sizes = [8, 8], strides = [1, 1]} : vector<8x32xbf16> to vector<8x8xbf16>
    %92 = vector.extract_strided_slice %26 {offsets = [0, 24], sizes = [8, 8], strides = [1, 1]} : vector<8x32xbf16> to vector<8x8xbf16>
    %cst_43 = arith.constant dense<0.000000e+00> : vector<8x8xf32>
    %93 = tpu.matmul %90, %91, %cst_43 {dimension_numbers = #tpu.dot_dimension_numbers<[1], [1], [0], [0], [0, 0, 1, 0], [], []>} : vector<8x8xbf16>, vector<8x8xbf16>, vector<8x8xf32> -> vector<8x8xf32>
    %cst_44 = arith.constant dense<0xFF800000> : vector<8xf32>
    %94 = vector.multi_reduction <maximumf>, %93, %cst_44 [1] : vector<8x8xf32> to vector<8xf32>
    %95 = vector.shape_cast %94 : vector<8xf32> to vector<8x1xf32>
    %96 = vector.broadcast %95 : vector<8x1xf32> to vector<8x8xf32>
    %97 = arith.subf %93, %96 : vector<8x8xf32>
    %98 = math.exp %97 : vector<8x8xf32>
    %cst_45 = arith.constant dense<0.000000e+00> : vector<8xf32>
    %99 = vector.multi_reduction <add>, %98, %cst_45 [1] : vector<8x8xf32> to vector<8xf32>
    %100 = vector.shape_cast %99 : vector<8xf32> to vector<8x1xf32>
    %101 = tpu.reciprocal %100 {approx = true} : vector<8x1xf32> -> vector<8x1xf32>
    %102 = vector.broadcast %101 : vector<8x1xf32> to vector<8x8xf32>
    %103 = arith.mulf %98, %102 : vector<8x8xf32>
    %104 = arith.truncf %103 : vector<8x8xf32> to vector<8x8xbf16>
    %cst_46 = arith.constant dense<0.000000e+00> : vector<8x8xf32>
    %105 = tpu.matmul %104, %92, %cst_46 {dimension_numbers = #tpu.dot_dimension_numbers<[1], [0], [0], [1], [0, 0, 1, 1], [], []>} : vector<8x8xbf16>, vector<8x8xbf16>, vector<8x8xf32> -> vector<8x8xf32>
    %106 = arith.truncf %105 : vector<8x8xf32> to vector<8x8xbf16>
    %c24 = arith.constant 24 : index
    %c0_47 = arith.constant 0 : index
    %107 = vector.load %arg8[%c24, %c0_47] : memref<32x32xbf16, #tpu.memory_space<vmem>>, vector<8x32xbf16>
    %cst_48 = arith.constant dense<0.000000e+00> : vector<8x32xf32>
    %108 = tpu.matmul %106, %107, %cst_48 {dimension_numbers = #tpu.dot_dimension_numbers<[1], [0], [0], [1], [0, 0, 1, 1], [], []>} : vector<8x8xbf16>, vector<8x32xbf16>, vector<8x32xf32> -> vector<8x32xf32>
    %109 = arith.addf %89, %108 : vector<8x32xf32>
    %c0_49 = arith.constant 0 : index
    %c0_50 = arith.constant 0 : index
    %c0_51 = arith.constant 0 : index
    %110 = vector.load %arg13[%c0_49, %c0_50, %c0_51] : memref<1x8x32xf32, #tpu.memory_space<vmem>>, vector<1x8x32xf32>
    %111 = vector.shape_cast %110 : vector<1x8x32xf32> to vector<8x32xf32>
    %112 = vector.shape_cast %109 : vector<8x32xf32> to vector<1x8x32xf32>
    tpu.vector_store %arg13[%c0_49, %c0_50, %c0_51], %112 {strides = array<i32>} : memref<1x8x32xf32, #tpu.memory_space<vmem>>, vector<1x8x32xf32>,
    return
  }
  func.func @transform_0(%arg0: i32, %arg1: i32) -> (i32, i32, i32) {
    %c0_i32 = arith.constant 0 : i32
    %c0_i32_0 = arith.constant 0 : i32
    return %arg0, %arg1, %c0_i32 : i32, i32, i32
  }
  func.func @transform_1(%arg0: i32, %arg1: i32) -> (i32, i32, i32) {
    %c0_i32 = arith.constant 0 : i32
    %c0_i32_0 = arith.constant 0 : i32
    %c0_i32_1 = arith.constant 0 : i32
    return %arg0, %c0_i32, %c0_i32_0 : i32, i32, i32
  }
  func.func @transform_2(%arg0: i32, %arg1: i32) -> (i32, i32, i32) {
    %c0_i32 = arith.constant 0 : i32
    %c0_i32_0 = arith.constant 0 : i32
    %c0_i32_1 = arith.constant 0 : i32
    return %arg0, %c0_i32, %c0_i32_0 : i32, i32, i32
  }
  func.func @transform_3(%arg0: i32, %arg1: i32) -> (i32, i32) {
    %c0_i32 = arith.constant 0 : i32
    %c0_i32_0 = arith.constant 0 : i32
    %c0_i32_1 = arith.constant 0 : i32
    return %c0_i32, %c0_i32_0 : i32, i32
  }
  func.func @transform_4(%arg0: i32, %arg1: i32) -> (i32, i32) {
    %c0_i32 = arith.constant 0 : i32
    %c0_i32_0 = arith.constant 0 : i32
    %c0_i32_1 = arith.constant 0 : i32
    return %c0_i32, %c0_i32_0 : i32, i32
  }
  func.func @transform_5(%arg0: i32, %arg1: i32) -> (i32, i32) {
    %c0_i32 = arith.constant 0 : i32
    %c0_i32_0 = arith.constant 0 : i32
    %c0_i32_1 = arith.constant 0 : i32
    return %c0_i32, %c0_i32_0 : i32, i32
  }
  func.func @transform_6(%arg0: i32, %arg1: i32) -> (i32, i32) {
    %c0_i32 = arith.constant 0 : i32
    %c0_i32_0 = arith.constant 0 : i32
    %c0_i32_1 = arith.constant 0 : i32
    return %c0_i32, %c0_i32_0 : i32, i32
  }
  func.func @transform_7(%arg0: i32, %arg1: i32) -> (i32, i32) {
    %c0_i32 = arith.constant 0 : i32
    %c0_i32_0 = arith.constant 0 : i32
    %c0_i32_1 = arith.constant 0 : i32
    return %c0_i32, %c0_i32_0 : i32, i32
  }
  func.func @transform_8(%arg0: i32, %arg1: i32) -> (i32, i32) {
    %c0_i32 = arith.constant 0 : i32
    %c0_i32_0 = arith.constant 0 : i32
    %c0_i32_1 = arith.constant 0 : i32
    return %c0_i32, %c0_i32_0 : i32, i32
  }
  func.func @transform_9(%arg0: i32, %arg1: i32) -> (i32, i32) {
    %c0_i32 = arith.constant 0 : i32
    %c0_i32_0 = arith.constant 0 : i32
    %c0_i32_1 = arith.constant 0 : i32
    return %c0_i32, %c0_i32_0 : i32, i32
  }
  func.func @transform_10(%arg0: i32, %arg1: i32) -> (i32, i32) {
    %c0_i32 = arith.constant 0 : i32
    %c0_i32_0 = arith.constant 0 : i32
    %c0_i32_1 = arith.constant 0 : i32
    return %c0_i32, %c0_i32_0 : i32, i32
  }
  func.func @transform_11(%arg0: i32, %arg1: i32) -> (i32, i32, i32) {
    %c0_i32 = arith.constant 0 : i32
    %c0_i32_0 = arith.constant 0 : i32
    return %arg0, %arg1, %c0_i32 : i32, i32, i32
  }
}

</mosaic_0001>

<llo_original>
// kernel: tpu_custom_call.1
$region0: #{tpu_custom_call.1}
  #allocation0 [shape = 'u32[]', space=smem, size = 0x4, offset = 0x4, fixed_abs, tag = 'smem constant byte address 0x4 - core index']
  #allocation1 [shape = 'u32[144,128]{1,0:T(1,128)}', space=vmem, size = 0x12000, scoped, tag = 'internal scratch']
  %s0 = inlined_call_operand.hbm [shape: f32[2,8,32], index: 0, kind: input, shape index: {}]
  %s1 = inlined_call_operand.hbm [shape: f32[2,8,32], index: 1, kind: input, shape index: {}]
  %s2 = inlined_call_operand.hbm [shape: f32[2,8,32], index: 2, kind: input, shape index: {}]
  %s3 = inlined_call_operand.hbm [shape: bf16[32,32], index: 3, kind: input, shape index: {}]
  %s4 = inlined_call_operand.hbm [shape: bf16[32,32], index: 4, kind: input, shape index: {}]
  %s5 = inlined_call_operand.vmem [shape: bf16[32,32], index: 5, kind: input, shape index: {}]
  %s6 = inlined_call_operand.hbm [shape: bf16[32,32], index: 6, kind: input, shape index: {}]
  %s7 = inlined_call_operand.vmem [shape: f32[1,32], index: 7, kind: input, shape index: {}]
  %s8 = inlined_call_operand.vmem [shape: f32[1,32], index: 8, kind: input, shape index: {}]
  %s9 = inlined_call_operand.vmem [shape: f32[1,32], index: 9, kind: input, shape index: {}]
  %s10 = inlined_call_operand.vmem [shape: f32[1,32], index: 10, kind: input, shape index: {}]
  %s11 = inlined_call_operand.hbm [shape: f32[2,8,32], index: 11, kind: output, shape index: {}]
  %s12 = sld [smem:[#allocation0]]
  $region101: #{tpu_custom_call.1} parent=0
    _
  %s14 = ssub.s32 1, %s12
  %s15 = scalar_select 0, %s14, %s12
  $region1: #{tpu_custom_call.1} parent=0
    #allocation2 [shape = 'u8[8192]{0}', space=vmem, size = 0x2000, scoped, tag = 'input window, operand 0']
    #allocation3 [shape = 's32[2]{0}', space=sflag, size = 0x8, scoped, tag = 'scoped memory for tpu_custom_call.1']
    #allocation4 [shape = 's32[2]{0}', space=sflag, size = 0x8, scoped, tag = 'scoped memory for tpu_custom_call.1']
    #allocation5 [shape = 'u8[8192]{0}', space=vmem, size = 0x2000, scoped, tag = 'input window, operand 1']
    #allocation6 [shape = 's32[2]{0}', space=sflag, size = 0x8, scoped, tag = 'scoped memory for tpu_custom_call.1']
    #allocation7 [shape = 'u8[8192]{0}', space=vmem, size = 0x2000, scoped, tag = 'input window, operand 2']
    #allocation8 [shape = 'u8[8192]{0}', space=vmem, size = 0x2000, scoped, tag = 'input window, operand 3, single buffered']
    #allocation9 [shape = 's32[1]{0}', space=sflag, size = 0x4, scoped, tag = 'scoped memory for tpu_custom_call.1']
    #allocation10 [shape = 'u8[8192]{0}', space=vmem, size = 0x2000, scoped, tag = 'input window, operand 4, single buffered']
    #allocation11 [shape = 'u8[8192]{0}', space=vmem, size = 0x2000, scoped, tag = 'input window, operand 6, single buffered']
    #allocation12 [shape = 's32[1]{0}', space=sflag, size = 0x4, scoped, tag = 'scoped memory for tpu_custom_call.1']
    #allocation13 [shape = 'u8[8192]{0}', space=vmem, size = 0x2000, scoped, tag = 'output window, operand 0']
    %16 = vsyncpa [#allocation3], 0
    %s17 = scalar_lea.sflag [#allocation3], 1
    %18 = vsyncpa %s17, 0
    %19 = vsyncpa [#allocation6], 0
    %s20 = scalar_lea.sflag [#allocation6], 1
    %21 = vsyncpa %s20, 0
    %22 = vsyncpa [#allocation9], 0
    %23 = vsyncpa [#allocation12], 0
    %24 = vsyncpa [#allocation4], 0
    %s25 = scalar_lea.sflag [#allocation4], 1
    %26 = vsyncpa %s25, 0
    loop: start=0, step=1, limit=4
    $region2: #{tpu_custom_call.1} parent=1 // loop_pre_header
      _
    $region3: #{tpu_custom_call.1} parent=1 // loop_header
      %s28 = sphi 0, %s32
      %p29 = scmp.ge.s32.totalorder %s28, 4
      %s35 = sphi 0, %s47
      %s36 = sphi 0, %s43
      %s37 = sphi 0, %s35
      %s38 = sphi 0, %s36
      %s39 = sphi 0, %s37
      %s40 = sphi 0, %s38
      %s52 = sphi 0, %s54
      %s55 = sphi 0, %s52
      %s56 = sphi 0, %s55
      %s72 = sphi 0, %s56
      %s78 = sphi 0, %s80
      %s81 = sphi 0, %s78
      %s82 = sphi 0, %s81
      %s98 = sphi 0, %s82
      %s104 = sphi 0, %s106
      %s107 = sphi 0, %s104
      %s108 = sphi 0, %s107
      %s124 = sphi 0, %s108
      %s128 = sphi 0, %s128
      %s130 = sphi 0, %s128
      %s131 = sphi 0, %s130
      %s145 = sphi 0, %s131
      %s149 = sphi 0, %s149
      %s151 = sphi 0, %s149
      %s152 = sphi 0, %s151
      %s166 = sphi 0, %s152
      %s170 = sphi 0, %s170
      %s172 = sphi 0, %s170
      %s173 = sphi 0, %s172
      %s187 = sphi 0, %s173
      %s191 = sphi 0, %s191
      %s193 = sphi 0, %s191
      %s194 = sphi 0, %s193
      %s208 = sphi 0, %s194
      %s212 = sphi 0, %s212
      %s214 = sphi 0, %s212
      %s215 = sphi 0, %s214
      %s229 = sphi 0, %s215
      %s233 = sphi 0, %s233
      %s235 = sphi 0, %s233
      %s236 = sphi 0, %s235
      %s250 = sphi 0, %s236
      %s254 = sphi 0, %s254
      %s256 = sphi 0, %s254
      %s257 = sphi 0, %s256
      %s271 = sphi 0, %s257
      %s275 = sphi 0, %s275
      %s277 = sphi 0, %s275
      %s278 = sphi 0, %s277
      %s292 = sphi 0, %s278
      %s300 = sphi 0, %s302
      %s303 = sphi 0, %s300
      %s304 = sphi 0, %s303
      %s320 = sphi 0, %s304
    $region4: #{tpu_custom_call.1} parent=1 // loop_header_branch
      %31 = sbr.rel (%p29) target = $region8
    $region5: #{tpu_custom_call.1} parent=1 // loop_body
      %s33 = ssub.s32 %s28, 1
      %s34 = ssub.s32 %s28, 2
      %s41 = sadd.s32 1, %s36
      %p42 = scmp.ge.s32.totalorder %s41, 1
      %s43 = scalar_select %p42, 0, %s41
      %s44 = sadd.s32 1, %s35
      %s45 = scalar_select %p42, %s44, %s35
      %p46 = scmp.ge.s32.totalorder %s45, 2
      %s47 = scalar_select %p46, 0, %s45
      %s48 = ssub.s32 %s35, %s47
      %s49 = ssub.s32 %s36, %s43
      %s50 = sor.u32 %s48, %s49
      %p51 = scmp.eq.s32.totalorder %s50, 0
      %s53 = sadd.s32 %s52, 1
      %s54 = scalar_select %p51, %s52, %s53
      %p57 = pneg %p51
      %p58 = scmp.eq.s32.totalorder %s28, 1
      %p59 = por %p57, %p58
      %p60 = scmp.ne.s32.totalorder %s52, %s55
      %p61 = scmp.eq.s32.totalorder %s28, 0
      %p62 = por %p60, %p61
      %p63 = scmp.ne.s32.totalorder %s52, %s55
      %p64 = scmp.eq.s32.totalorder %s33, 1
      %p65 = por %p63, %p64
      %p66 = scmp.ne.s32.totalorder %s55, %s56
      %p67 = scmp.eq.s32.totalorder %s33, 0
      %p68 = por %p66, %p67
      %p69 = scmp.ne.s32.totalorder %s55, %s56
      %p70 = scmp.eq.s32.totalorder %s34, 1
      %p71 = por %p69, %p70
      %p73 = scmp.ne.s32.totalorder %s56, %s72
      %p74 = scmp.eq.s32.totalorder %s34, 0
      %p75 = por %p73, %p74
      %s76 = ssub.s32 %s35, %s47
      %p77 = scmp.eq.s32.totalorder %s76, 0
      %s79 = sadd.s32 %s78, 1
      %s80 = scalar_select %p77, %s78, %s79
      %p83 = pneg %p77
      %p84 = scmp.eq.s32.totalorder %s28, 1
      %p85 = por %p83, %p84
      %p86 = scmp.ne.s32.totalorder %s78, %s81
      %p87 = scmp.eq.s32.totalorder %s28, 0
      %p88 = por %p86, %p87
      %p89 = scmp.ne.s32.totalorder %s78, %s81
      %p90 = scmp.eq.s32.totalorder %s33, 1
      %p91 = por %p89, %p90
      %p92 = scmp.ne.s32.totalorder %s81, %s82
      %p93 = scmp.eq.s32.totalorder %s33, 0
      %p94 = por %p92, %p93
      %p95 = scmp.ne.s32.totalorder %s81, %s82
      %p96 = scmp.eq.s32.totalorder %s34, 1
      %p97 = por %p95, %p96
      %p99 = scmp.ne.s32.totalorder %s82, %s98
      %p100 = scmp.eq.s32.totalorder %s34, 0
      %p101 = por %p99, %p100
      %s102 = ssub.s32 %s35, %s47
      %p103 = scmp.eq.s32.totalorder %s102, 0
      %s105 = sadd.s32 %s104, 1
      %s106 = scalar_select %p103, %s104, %s105
      %p109 = pneg %p103
      %p110 = scmp.eq.s32.totalorder %s28, 1
      %p111 = por %p109, %p110
      %p112 = scmp.ne.s32.totalorder %s104, %s107
      %p113 = scmp.eq.s32.totalorder %s28, 0
      %p114 = por %p112, %p113
      %p115 = scmp.ne.s32.totalorder %s104, %s107
      %p116 = scmp.eq.s32.totalorder %s33, 1
      %p117 = por %p115, %p116
      %p118 = scmp.ne.s32.totalorder %s107, %s108
      %p119 = scmp.eq.s32.totalorder %s33, 0
      %p120 = por %p118, %p119
      %p121 = scmp.ne.s32.totalorder %s107, %s108
      %p122 = scmp.eq.s32.totalorder %s34, 1
      %p123 = por %p121, %p122
      %p125 = scmp.ne.s32.totalorder %s108, %s124
      %p126 = scmp.eq.s32.totalorder %s34, 0
      %p127 = por %p125, %p126
      %s129 = sadd.s32 %s128, 1
      %p132 = scmp.eq.s32.totalorder %s28, 1
      %p133 = scmp.ne.s32.totalorder %s128, %s130
      %p134 = scmp.eq.s32.totalorder %s28, 0
      %p135 = por %p133, %p134
      %p136 = scmp.ne.s32.totalorder %s128, %s130
      %p137 = scmp.eq.s32.totalorder %s33, 1
      %p138 = por %p136, %p137
      %p139 = scmp.ne.s32.totalorder %s130, %s131
      %p140 = scmp.eq.s32.totalorder %s33, 0
      %p141 = por %p139, %p140
      %p142 = scmp.ne.s32.totalorder %s130, %s131
      %p143 = scmp.eq.s32.totalorder %s34, 1
      %p144 = por %p142, %p143
      %p146 = scmp.ne.s32.totalorder %s131, %s145
      %p147 = scmp.eq.s32.totalorder %s34, 0
      %p148 = por %p146, %p147
      %s150 = sadd.s32 %s149, 1
      %p153 = scmp.eq.s32.totalorder %s28, 1
      %p154 = scmp.ne.s32.totalorder %s149, %s151
      %p155 = scmp.eq.s32.totalorder %s28, 0
      %p156 = por %p154, %p155
      %p157 = scmp.ne.s32.totalorder %s149, %s151
      %p158 = scmp.eq.s32.totalorder %s33, 1
      %p159 = por %p157, %p158
      %p160 = scmp.ne.s32.totalorder %s151, %s152
      %p161 = scmp.eq.s32.totalorder %s33, 0
      %p162 = por %p160, %p161
      %p163 = scmp.ne.s32.totalorder %s151, %s152
      %p164 = scmp.eq.s32.totalorder %s34, 1
      %p165 = por %p163, %p164
      %p167 = scmp.ne.s32.totalorder %s152, %s166
      %p168 = scmp.eq.s32.totalorder %s34, 0
      %p169 = por %p167, %p168
      %s171 = sadd.s32 %s170, 1
      %p174 = scmp.eq.s32.totalorder %s28, 1
      %p175 = scmp.ne.s32.totalorder %s170, %s172
      %p176 = scmp.eq.s32.totalorder %s28, 0
      %p177 = por %p175, %p176
      %p178 = scmp.ne.s32.totalorder %s170, %s172
      %p179 = scmp.eq.s32.totalorder %s33, 1
      %p180 = por %p178, %p179
      %p181 = scmp.ne.s32.totalorder %s172, %s173
      %p182 = scmp.eq.s32.totalorder %s33, 0
      %p183 = por %p181, %p182
      %p184 = scmp.ne.s32.totalorder %s172, %s173
      %p185 = scmp.eq.s32.totalorder %s34, 1
      %p186 = por %p184, %p185
      %p188 = scmp.ne.s32.totalorder %s173, %s187
      %p189 = scmp.eq.s32.totalorder %s34, 0
      %p190 = por %p188, %p189
      %s192 = sadd.s32 %s191, 1
      %p195 = scmp.eq.s32.totalorder %s28, 1
      %p196 = scmp.ne.s32.totalorder %s191, %s193
      %p197 = scmp.eq.s32.totalorder %s28, 0
      %p198 = por %p196, %p197
      %p199 = scmp.ne.s32.totalorder %s191, %s193
      %p200 = scmp.eq.s32.totalorder %s33, 1
      %p201 = por %p199, %p200
      %p202 = scmp.ne.s32.totalorder %s193, %s194
      %p203 = scmp.eq.s32.totalorder %s33, 0
      %p204 = por %p202, %p203
      %p205 = scmp.ne.s32.totalorder %s193, %s194
      %p206 = scmp.eq.s32.totalorder %s34, 1
      %p207 = por %p205, %p206
      %p209 = scmp.ne.s32.totalorder %s194, %s208
      %p210 = scmp.eq.s32.totalorder %s34, 0
      %p211 = por %p209, %p210
      %s213 = sadd.s32 %s212, 1
      %p216 = scmp.eq.s32.totalorder %s28, 1
      %p217 = scmp.ne.s32.totalorder %s212, %s214
      %p218 = scmp.eq.s32.totalorder %s28, 0
      %p219 = por %p217, %p218
      %p220 = scmp.ne.s32.totalorder %s212, %s214
      %p221 = scmp.eq.s32.totalorder %s33, 1
      %p222 = por %p220, %p221
      %p223 = scmp.ne.s32.totalorder %s214, %s215
      %p224 = scmp.eq.s32.totalorder %s33, 0
      %p225 = por %p223, %p224
      %p226 = scmp.ne.s32.totalorder %s214, %s215
      %p227 = scmp.eq.s32.totalorder %s34, 1
      %p228 = por %p226, %p227
      %p230 = scmp.ne.s32.totalorder %s215, %s229
      %p231 = scmp.eq.s32.totalorder %s34, 0
      %p232 = por %p230, %p231
      %s234 = sadd.s32 %s233, 1
      %p237 = scmp.eq.s32.totalorder %s28, 1
      %p238 = scmp.ne.s32.totalorder %s233, %s235
      %p239 = scmp.eq.s32.totalorder %s28, 0
      %p240 = por %p238, %p239
      %p241 = scmp.ne.s32.totalorder %s233, %s235
      %p242 = scmp.eq.s32.totalorder %s33, 1
      %p243 = por %p241, %p242
      %p244 = scmp.ne.s32.totalorder %s235, %s236
      %p245 = scmp.eq.s32.totalorder %s33, 0
      %p246 = por %p244, %p245
      %p247 = scmp.ne.s32.totalorder %s235, %s236
      %p248 = scmp.eq.s32.totalorder %s34, 1
      %p249 = por %p247, %p248
      %p251 = scmp.ne.s32.totalorder %s236, %s250
      %p252 = scmp.eq.s32.totalorder %s34, 0
      %p253 = por %p251, %p252
      %s255 = sadd.s32 %s254, 1
      %p258 = scmp.eq.s32.totalorder %s28, 1
      %p259 = scmp.ne.s32.totalorder %s254, %s256
      %p260 = scmp.eq.s32.totalorder %s28, 0
      %p261 = por %p259, %p260
      %p262 = scmp.ne.s32.totalorder %s254, %s256
      %p263 = scmp.eq.s32.totalorder %s33, 1
      %p264 = por %p262, %p263
      %p265 = scmp.ne.s32.totalorder %s256, %s257
      %p266 = scmp.eq.s32.totalorder %s33, 0
      %p267 = por %p265, %p266
      %p268 = scmp.ne.s32.totalorder %s256, %s257
      %p269 = scmp.eq.s32.totalorder %s34, 1
      %p270 = por %p268, %p269
      %p272 = scmp.ne.s32.totalorder %s257, %s271
      %p273 = scmp.eq.s32.totalorder %s34, 0
      %p274 = por %p272, %p273
      %s276 = sadd.s32 %s275, 1
      %p279 = scmp.eq.s32.totalorder %s28, 1
      %p280 = scmp.ne.s32.totalorder %s275, %s277
      %p281 = scmp.eq.s32.totalorder %s28, 0
      %p282 = por %p280, %p281
      %p283 = scmp.ne.s32.totalorder %s275, %s277
      %p284 = scmp.eq.s32.totalorder %s33, 1
      %p285 = por %p283, %p284
      %p286 = scmp.ne.s32.totalorder %s277, %s278
      %p287 = scmp.eq.s32.totalorder %s33, 0
      %p288 = por %p286, %p287
      %p289 = scmp.ne.s32.totalorder %s277, %s278
      %p290 = scmp.eq.s32.totalorder %s34, 1
      %p291 = por %p289, %p290
      %p293 = scmp.ne.s32.totalorder %s278, %s292
      %p294 = scmp.eq.s32.totalorder %s34, 0
      %p295 = por %p293, %p294
      %s296 = ssub.s32 %s35, %s47
      %s297 = ssub.s32 %s36, %s43
      %s298 = sor.u32 %s296, %s297
      %p299 = scmp.eq.s32.totalorder %s298, 0
      %s301 = sadd.s32 %s300, 1
      %s302 = scalar_select %p299, %s300, %s301
      %p305 = pneg %p299
      %p306 = scmp.eq.s32.totalorder %s28, 1
      %p307 = por %p305, %p306
      %p308 = scmp.ne.s32.totalorder %s300, %s303
      %p309 = scmp.eq.s32.totalorder %s28, 0
      %p310 = por %p308, %p309
      %p311 = scmp.ne.s32.totalorder %s300, %s303
      %p312 = scmp.eq.s32.totalorder %s33, 1
      %p313 = por %p311, %p312
      %p314 = scmp.ne.s32.totalorder %s303, %s304
      %p315 = scmp.eq.s32.totalorder %s33, 0
      %p316 = por %p314, %p315
      %p317 = scmp.ne.s32.totalorder %s303, %s304
      %p318 = scmp.eq.s32.totalorder %s34, 1
      %p319 = por %p317, %p318
      %p321 = scmp.ne.s32.totalorder %s304, %s320
      %p322 = scmp.eq.s32.totalorder %s34, 0
      %p323 = por %p321, %p322
      %p324 = scmp.le.s32.totalorder 1, %s28
      %p325 = scmp.lt.s32.totalorder %s28, 3
      %p326 = pnand %p324, %p325
      %p327 = pneg %p326
      // Predicated region
      $region9: #{tpu_custom_call.1} parent=5 // pred_check
        _
      $region10: #{tpu_custom_call.1} parent=5 // pred_check_branch
        %329 = sbr.rel (%p326) target = $region12
      $region11: #{tpu_custom_call.1} parent=5 // pred_region
        %s330 = ssub.s32 %s28, 1
        // Predicated region
        $region13: #{tpu_custom_call.1} parent=11 // pred_check
          %p331 = pneg %p141
        $region14: #{tpu_custom_call.1} parent=11 // pred_check_branch
          %333 = sbr.rel (%p331) target = $region16
        $region15: #{tpu_custom_call.1} parent=11 // pred_region
          %s335 = ssub.s32 256, 256
          %336 = vsyncadd [#allocation9], %s335
          %s337 = sshll.u32 [#allocation8], 4
          %s338 = int_to_ptr.vmem [resolvable:$true] %s337
          %343 = dma.hbm_to_vmem [thread:$0]  %s3, 256, %s338, [#allocation9], 64, 64, 4
        $region16: #{tpu_custom_call.1} parent=11 // pred_fallthru
          _
        // Predicated region
        $region17: #{tpu_custom_call.1} parent=11 // pred_check
          %p344 = pneg %p162
        $region18: #{tpu_custom_call.1} parent=11 // pred_check_branch
          %346 = sbr.rel (%p344) target = $region20
        $region19: #{tpu_custom_call.1} parent=11 // pred_region
          %s348 = ssub.s32 256, 256
          %349 = vsyncadd [#allocation9], %s348
          %s350 = sshll.u32 [#allocation10], 4
          %s351 = int_to_ptr.vmem [resolvable:$true] %s350
          %356 = dma.hbm_to_vmem [thread:$0]  %s4, 256, %s351, [#allocation9], 64, 64, 4
        $region20: #{tpu_custom_call.1} parent=11 // pred_fallthru
          _
        // Predicated region
        $region21: #{tpu_custom_call.1} parent=11 // pred_check
          %p357 = pneg %p183
        $region22: #{tpu_custom_call.1} parent=11 // pred_check_branch
          %359 = sbr.rel (%p357) target = $region24
        $region23: #{tpu_custom_call.1} parent=11 // pred_region
          _
        $region24: #{tpu_custom_call.1} parent=11 // pred_fallthru
          _
        // Predicated region
        $region25: #{tpu_custom_call.1} parent=11 // pred_check
          %p360 = pneg %p204
        $region26: #{tpu_custom_call.1} parent=11 // pred_check_branch
          %362 = sbr.rel (%p360) target = $region28
        $region27: #{tpu_custom_call.1} parent=11 // pred_region
          %s364 = ssub.s32 256, 256
          %365 = vsyncadd [#allocation12], %s364
          %s366 = sshll.u32 [#allocation11], 4
          %s367 = int_to_ptr.vmem [resolvable:$true] %s366
          %372 = dma.hbm_to_vmem [thread:$0]  %s6, 256, %s367, [#allocation12], 64, 64, 4
        $region28: #{tpu_custom_call.1} parent=11 // pred_fallthru
          _
        // Predicated region
        $region29: #{tpu_custom_call.1} parent=11 // pred_check
          %p373 = pneg %p225
        $region30: #{tpu_custom_call.1} parent=11 // pred_check_branch
          %375 = sbr.rel (%p373) target = $region32
        $region31: #{tpu_custom_call.1} parent=11 // pred_region
          _
        $region32: #{tpu_custom_call.1} parent=11 // pred_fallthru
          _
        // Predicated region
        $region33: #{tpu_custom_call.1} parent=11 // pred_check
          %p376 = pneg %p246
        $region34: #{tpu_custom_call.1} parent=11 // pred_check_branch
          %378 = sbr.rel (%p376) target = $region36
        $region35: #{tpu_custom_call.1} parent=11 // pred_region
          _
        $region36: #{tpu_custom_call.1} parent=11 // pred_fallthru
          _
        // Predicated region
        $region37: #{tpu_custom_call.1} parent=11 // pred_check
          %p379 = pneg %p267
        $region38: #{tpu_custom_call.1} parent=11 // pred_check_branch
          %381 = sbr.rel (%p379) target = $region40
        $region39: #{tpu_custom_call.1} parent=11 // pred_region
          _
        $region40: #{tpu_custom_call.1} parent=11 // pred_fallthru
          _
        // Predicated region
        $region41: #{tpu_custom_call.1} parent=11 // pred_check
          %p382 = pneg %p288
        $region42: #{tpu_custom_call.1} parent=11 // pred_check_branch
          %384 = sbr.rel (%p382) target = $region44
        $region43: #{tpu_custom_call.1} parent=11 // pred_region
          _
        $region44: #{tpu_custom_call.1} parent=11 // pred_fallthru
          _
      $region12: #{tpu_custom_call.1} parent=5 // pred_fallthru
        _
      %p385 = scmp.lt.s32.totalorder %s28, 2
      // Predicated region
      $region45: #{tpu_custom_call.1} parent=5 // pred_check
        %p386 = pneg %p385
      $region46: #{tpu_custom_call.1} parent=5 // pred_check_branch
        %388 = sbr.rel (%p386) target = $region48
      $region47: #{tpu_custom_call.1} parent=5 // pred_region
        // Predicated region
        $region49: #{tpu_custom_call.1} parent=47 // pred_check
          %p389 = pneg %p62
        $region50: #{tpu_custom_call.1} parent=47 // pred_check_branch
          %391 = sbr.rel (%p389) target = $region52
        $region51: #{tpu_custom_call.1} parent=47 // pred_region
          %s392 = sand.u32 %s52, 1
          %s393 = scalar_lea.sflag [#allocation3], %s392
          %s394 = sand.u32 %s52, 1
          %s395 = smul.addr %s394, 8
          %s396 = scalar_lea.vmem [#allocation2], %s395
          %s398 = ssub.s32 128, 128
          %399 = vsyncadd %s393, %s398
          %s400 = sadd.s32 %s36, %s35
          %s401 = smul.addr %s400, 128
          %s402 = scalar_lea.hbm %s0, %s401
          %s404 = sshll.u32 %s396, 4
          %s405 = int_to_ptr.vmem [resolvable:$true] %s404
          %407 = dma.hbm_to_vmem [thread:$0]  %s402, 128, %s405, %s393
        $region52: #{tpu_custom_call.1} parent=47 // pred_fallthru
          _
        // Predicated region
        $region53: #{tpu_custom_call.1} parent=47 // pred_check
          %p408 = pneg %p88
        $region54: #{tpu_custom_call.1} parent=47 // pred_check_branch
          %410 = sbr.rel (%p408) target = $region56
        $region55: #{tpu_custom_call.1} parent=47 // pred_region
          %s411 = sand.u32 %s28, 1
          %s412 = scalar_lea.sflag [#allocation6], %s411
          %s413 = sand.u32 %s78, 1
          %s414 = smul.addr %s413, 8
          %s415 = scalar_lea.vmem [#allocation5], %s414
          %s417 = ssub.s32 128, 128
          %418 = vsyncadd %s412, %s417
          %s419 = smul.addr %s35, 128
          %s420 = scalar_lea.hbm %s1, %s419
          %s422 = sshll.u32 %s415, 4
          %s423 = int_to_ptr.vmem [resolvable:$true] %s422
          %425 = dma.hbm_to_vmem [thread:$0]  %s420, 128, %s423, %s412
        $region56: #{tpu_custom_call.1} parent=47 // pred_fallthru
          _
        // Predicated region
        $region57: #{tpu_custom_call.1} parent=47 // pred_check
          %p426 = pneg %p114
        $region58: #{tpu_custom_call.1} parent=47 // pred_check_branch
          %428 = sbr.rel (%p426) target = $region60
        $region59: #{tpu_custom_call.1} parent=47 // pred_region
          %s429 = sand.u32 %s28, 1
          %s430 = scalar_lea.sflag [#allocation6], %s429
          %s431 = sand.u32 %s104, 1
          %s432 = smul.addr %s431, 8
          %s433 = scalar_lea.vmem [#allocation7], %s432
          %s435 = ssub.s32 128, 128
          %436 = vsyncadd %s430, %s435
          %s437 = smul.addr %s35, 128
          %s438 = scalar_lea.hbm %s2, %s437
          %s440 = sshll.u32 %s433, 4
          %s441 = int_to_ptr.vmem [resolvable:$true] %s440
          %443 = dma.hbm_to_vmem [thread:$0]  %s438, 128, %s441, %s430
        $region60: #{tpu_custom_call.1} parent=47 // pred_fallthru
          _
      $region48: #{tpu_custom_call.1} parent=5 // pred_fallthru
        _
      %p444 = scmp.le.s32.totalorder 1, %s28
      %p445 = scmp.lt.s32.totalorder %s28, 3
      %p446 = pnand %p444, %p445
      %p447 = pneg %p446
      // Predicated region
      $region61: #{tpu_custom_call.1} parent=5 // pred_check
        _
      $region62: #{tpu_custom_call.1} parent=5 // pred_check_branch
        %449 = sbr.rel (%p446) target = $region64
      $region63: #{tpu_custom_call.1} parent=5 // pred_region
        %s450 = ssub.s32 %s28, 1
        %s451 = sand.u32 %s55, 1
        %s452 = scalar_lea.sflag [#allocation3], %s451
        %s453 = sand.u32 %s55, 1
        %s454 = smul.addr %s453, 8
        %s455 = scalar_lea.vmem [#allocation2], %s454
        // Predicated region
        $region65: #{tpu_custom_call.1} parent=63 // pred_check
          %p456 = pneg %p68
        $region66: #{tpu_custom_call.1} parent=63 // pred_check_branch
          %458 = sbr.rel (%p456) target = $region68
        $region67: #{tpu_custom_call.1} parent=63 // pred_region
          %459 = dma.done %s452, 128
        $region68: #{tpu_custom_call.1} parent=63 // pred_fallthru
          _
        %s460 = sand.u32 %s33, 1
        %s461 = scalar_lea.sflag [#allocation6], %s460
        %s462 = sand.u32 %s81, 1
        %s463 = smul.addr %s462, 8
        %s464 = scalar_lea.vmem [#allocation5], %s463
        // Predicated region
        $region69: #{tpu_custom_call.1} parent=63 // pred_check
          %p465 = pneg %p94
        $region70: #{tpu_custom_call.1} parent=63 // pred_check_branch
          %467 = sbr.rel (%p465) target = $region72
        $region71: #{tpu_custom_call.1} parent=63 // pred_region
          %468 = dma.done %s461, 128
        $region72: #{tpu_custom_call.1} parent=63 // pred_fallthru
          _
        %s469 = sand.u32 %s33, 1
        %s470 = scalar_lea.sflag [#allocation6], %s469
        %s471 = sand.u32 %s107, 1
        %s472 = smul.addr %s471, 8
        %s473 = scalar_lea.vmem [#allocation7], %s472
        // Predicated region
        $region73: #{tpu_custom_call.1} parent=63 // pred_check
          %p474 = pneg %p120
        $region74: #{tpu_custom_call.1} parent=63 // pred_check_branch
          %476 = sbr.rel (%p474) target = $region76
        $region75: #{tpu_custom_call.1} parent=63 // pred_region
          %477 = dma.done %s470, 128
        $region76: #{tpu_custom_call.1} parent=63 // pred_fallthru
          _
        // Predicated region
        $region77: #{tpu_custom_call.1} parent=63 // pred_check
          %p478 = pneg %p141
        $region78: #{tpu_custom_call.1} parent=63 // pred_check_branch
          %480 = sbr.rel (%p478) target = $region80
        $region79: #{tpu_custom_call.1} parent=63 // pred_region
          %481 = dma.done [#allocation9], 256
        $region80: #{tpu_custom_call.1} parent=63 // pred_fallthru
          _
        // Predicated region
        $region81: #{tpu_custom_call.1} parent=63 // pred_check
          %p482 = pneg %p162
        $region82: #{tpu_custom_call.1} parent=63 // pred_check_branch
          %484 = sbr.rel (%p482) target = $region84
        $region83: #{tpu_custom_call.1} parent=63 // pred_region
          %485 = dma.done [#allocation9], 256
        $region84: #{tpu_custom_call.1} parent=63 // pred_fallthru
          _
        // Predicated region
        $region85: #{tpu_custom_call.1} parent=63 // pred_check
          %p486 = pneg %p204
        $region86: #{tpu_custom_call.1} parent=63 // pred_check_branch
          %488 = sbr.rel (%p486) target = $region88
        $region87: #{tpu_custom_call.1} parent=63 // pred_region
          %489 = dma.done [#allocation12], 256
        $region88: #{tpu_custom_call.1} parent=63 // pred_fallthru
          _
        %s490 = sand.u32 %s55, 1
        %s491 = scalar_lea.sflag [#allocation3], %s490
        %s492 = sand.u32 %s55, 1
        %s493 = smul.addr %s492, 8
        %s494 = scalar_lea.vmem [#allocation2], %s493
        %p495 = pneg %p68
        %p496 = pneg %p65
        %s497 = sand.u32 %s33, 1
        %s498 = scalar_lea.sflag [#allocation6], %s497
        %s499 = sand.u32 %s81, 1
        %s500 = smul.addr %s499, 8
        %s501 = scalar_lea.vmem [#allocation5], %s500
        %p502 = pneg %p94
        %p503 = pneg %p91
        %s504 = sand.u32 %s33, 1
        %s505 = scalar_lea.sflag [#allocation6], %s504
        %s506 = sand.u32 %s107, 1
        %s507 = smul.addr %s506, 8
        %s508 = scalar_lea.vmem [#allocation7], %s507
        %p509 = pneg %p120
        %p510 = pneg %p117
        %p511 = pneg %p141
        %p512 = pneg %p138
        %p513 = pneg %p162
        %p514 = pneg %p159
        %p515 = pneg %p183
        %p516 = pneg %p180
        %p517 = pneg %p204
        %p518 = pneg %p201
        %p519 = pneg %p225
        %p520 = pneg %p222
        %p521 = pneg %p246
        %p522 = pneg %p243
        %p523 = pneg %p267
        %p524 = pneg %p264
        %p525 = pneg %p288
        %p526 = pneg %p285
        %p527 = pneg %p316
        %p528 = pneg %p313
        %s529 = sand.u32 %s303, 1
        %s530 = scalar_lea.sflag [#allocation4], %s529
        %s531 = sand.u32 %s303, 1
        %s532 = smul.addr %s531, 8
        %s533 = scalar_lea.vmem [#allocation13], %s532
        %v535 = vld [vmem:[%s455] sm:$0xff]
        %v536 = vpack.c.bf16 %v535, %v535
        %v537 = vld [vmem:[%s464] sm:$0xff]
        %v538 = vpack.c.bf16 %v537, %v537
        %v539 = vld [vmem:[%s473] sm:$0xff]
        %v540 = vpack.c.bf16 %v539, %v539
        %v541 = vld [vmem:[#allocation8] sm:$0xf]
        %v542 = vld [vmem:[#allocation8 + $0x4] sm:$0xf]
        %v543 = vld [vmem:[#allocation8 + $0x8] sm:$0xf]
        %v544 = vld [vmem:[#allocation8 + $0xc] sm:$0xf]
        %v545 = vld [vmem:[%s7] sm:$0x1]
        %v547 = vlaneseq
        %v548 = vshrl.u32 %v547, 7
        %v549 = vsub.s32 0, %v548
        %v550 = vrot.slane %v545, %v549
        %v556 = vunpack.c.l.b16 %v541
        %v557 = vunpack.c.l.b16 %v542
        %v558 = vunpack.c.l.b16 %v543
        %v559 = vunpack.c.l.b16 %v544
        %v560 = vpack.c.b16 %v557, %v556
        %v561 = vpack.c.b16 %v559, %v558
        %vm564 = vcmask 261120
        %v566 = vsel %vm564, %v536, 0
        %568 = vmatprep.subr.bf16.mxu0 0
        %569 = vmatpush1.bf16.msra.mxu0 %v560
        %570 = vmatprep.subr.bf16.mxu0 0
        %571 = vmatpush1.bf16.msra.mxu0 %v561
        %572 = vmatprep.subr.bf16.mxu0 0
        %573 = vmatpush1.bf16.msra.mxu0 0
        %574 = vmatprep.subr.bf16.mxu0 0
        %575 = vmatpush1.bf16.msra.mxu0 0
        %576 = vmatprep.subr.bf16.mxu0 0
        %577 = vmatpush1.bf16.msra.mxu0 0
        %578 = vmatprep.subr.bf16.mxu0 0
        %579 = vmatpush1.bf16.msra.mxu0 0
        %580 = vmatprep.subr.bf16.mxu0 0
        %581 = vmatpush1.bf16.msra.mxu0 0
        %582 = vmatprep.subr.bf16.mxu0 0
        %583 = vmatpush1.bf16.msra.mxu0 0
        %584 = vmatprep.subr.bf16.mxu0 0
        %585 = vmatpush1.bf16.msra.mxu0 0
        %586 = vmatprep.subr.bf16.mxu0 0
        %587 = vmatpush1.bf16.msra.mxu0 0
        %588 = vmatprep.subr.bf16.mxu0 0
        %589 = vmatpush1.bf16.msra.mxu0 0
        %590 = vmatprep.subr.bf16.mxu0 0
        %591 = vmatpush1.bf16.msra.mxu0 0
        %592 = vmatprep.subr.bf16.mxu0 0
        %593 = vmatpush1.bf16.msra.mxu0 0
        %594 = vmatprep.subr.bf16.mxu0 0
        %595 = vmatpush1.bf16.msra.mxu0 0
        %596 = vmatprep.subr.bf16.mxu0 0
        %597 = vmatpush1.bf16.msra.mxu0 0
        %598 = vmatprep.subr.bf16.mxu0 0
        %599 = vmatpush1.bf16.msra.mxu0 0
        %600 = vmatprep.mubr.bf16.mxu0 0
        %601 = vmatmul.mubr.bf16.gmra.mrb[0].mxu0 %v566
        %v602 = vpop.f32.mrb[0].mxu0
        %v603 = vadd.f32 %v550, %v602
        %v604 = vpop.f32.mrb[0].mxu0
        %v605 = vpop.f32.mrb[0].mxu0
        %v606 = vpop.f32.mrb[0].mxu0
        %607 = vdwg.mxu0
        %v608 = vpack.c.bf16 %v603, %v603
        %v609 = vld [vmem:[#allocation10] sm:$0xf]
        %v610 = vld [vmem:[#allocation10 + $0x4] sm:$0xf]
        %v611 = vld [vmem:[#allocation10 + $0x8] sm:$0xf]
        %v612 = vld [vmem:[#allocation10 + $0xc] sm:$0xf]
        %v613 = vld [vmem:[%s8] sm:$0x1]
        %v615 = vlaneseq
        %v616 = vshrl.u32 %v615, 7
        %v617 = vsub.s32 0, %v616
        %v618 = vrot.slane %v613, %v617
        %v624 = vunpack.c.l.b16 %v609
        %v625 = vunpack.c.l.b16 %v610
        %v626 = vunpack.c.l.b16 %v611
        %v627 = vunpack.c.l.b16 %v612
        %v628 = vpack.c.b16 %v625, %v624
        %v629 = vpack.c.b16 %v627, %v626
        %v633 = vsel %vm564, %v538, 0
        %635 = vmatprep.subr.bf16.mxu0 0
        %636 = vmatpush1.bf16.msra.mxu0 %v628
        %637 = vmatprep.subr.bf16.mxu0 0
        %638 = vmatpush1.bf16.msra.mxu0 %v629
        %639 = vmatprep.subr.bf16.mxu0 0
        %640 = vmatpush1.bf16.msra.mxu0 0
        %641 = vmatprep.subr.bf16.mxu0 0
        %642 = vmatpush1.bf16.msra.mxu0 0
        %643 = vmatprep.subr.bf16.mxu0 0
        %644 = vmatpush1.bf16.msra.mxu0 0
        %645 = vmatprep.subr.bf16.mxu0 0
        %646 = vmatpush1.bf16.msra.mxu0 0
        %647 = vmatprep.subr.bf16.mxu0 0
        %648 = vmatpush1.bf16.msra.mxu0 0
        %649 = vmatprep.subr.bf16.mxu0 0
        %650 = vmatpush1.bf16.msra.mxu0 0
        %651 = vmatprep.subr.bf16.mxu0 0
        %652 = vmatpush1.bf16.msra.mxu0 0
        %653 = vmatprep.subr.bf16.mxu0 0
        %654 = vmatpush1.bf16.msra.mxu0 0
        %655 = vmatprep.subr.bf16.mxu0 0
        %656 = vmatpush1.bf16.msra.mxu0 0
        %657 = vmatprep.subr.bf16.mxu0 0
        %658 = vmatpush1.bf16.msra.mxu0 0
        %659 = vmatprep.subr.bf16.mxu0 0
        %660 = vmatpush1.bf16.msra.mxu0 0
        %661 = vmatprep.subr.bf16.mxu0 0
        %662 = vmatpush1.bf16.msra.mxu0 0
        %663 = vmatprep.subr.bf16.mxu0 0
        %664 = vmatpush1.bf16.msra.mxu0 0
        %665 = vmatprep.subr.bf16.mxu0 0
        %666 = vmatpush1.bf16.msra.mxu0 0
        %667 = vmatprep.mubr.bf16.mxu0 0
        %668 = vmatmul.mubr.bf16.gmra.mrb[0].mxu0 %v633
        %v669 = vpop.f32.mrb[0].mxu0
        %v670 = vadd.f32 %v618, %v669
        %v671 = vpop.f32.mrb[0].mxu0
        %v672 = vpop.f32.mrb[0].mxu0
        %v673 = vpop.f32.mrb[0].mxu0
        %674 = vdwg.mxu0
        %v675 = vpack.c.bf16 %v670, %v670
        %v676 = vld [vmem:[%s5] sm:$0xf]
        %v677 = vld [vmem:[%s5 + $0x4] sm:$0xf]
        %v678 = vld [vmem:[%s5 + $0x8] sm:$0xf]
        %v679 = vld [vmem:[%s5 + $0xc] sm:$0xf]
        %v680 = vld [vmem:[%s9] sm:$0x1]
        %v682 = vlaneseq
        %v683 = vshrl.u32 %v682, 7
        %v684 = vsub.s32 0, %v683
        %v685 = vrot.slane %v680, %v684
        %v691 = vunpack.c.l.b16 %v676
        %v692 = vunpack.c.l.b16 %v677
        %v693 = vunpack.c.l.b16 %v678
        %v694 = vunpack.c.l.b16 %v679
        %v695 = vpack.c.b16 %v692, %v691
        %v696 = vpack.c.b16 %v694, %v693
        %v700 = vsel %vm564, %v540, 0
        %702 = vmatprep.subr.bf16.mxu0 0
        %703 = vmatpush1.bf16.msra.mxu0 %v695
        %704 = vmatprep.subr.bf16.mxu0 0
        %705 = vmatpush1.bf16.msra.mxu0 %v696
        %706 = vmatprep.subr.bf16.mxu0 0
        %707 = vmatpush1.bf16.msra.mxu0 0
        %708 = vmatprep.subr.bf16.mxu0 0
        %709 = vmatpush1.bf16.msra.mxu0 0
        %710 = vmatprep.subr.bf16.mxu0 0
        %711 = vmatpush1.bf16.msra.mxu0 0
        %712 = vmatprep.subr.bf16.mxu0 0
        %713 = vmatpush1.bf16.msra.mxu0 0
        %714 = vmatprep.subr.bf16.mxu0 0
        %715 = vmatpush1.bf16.msra.mxu0 0
        %716 = vmatprep.subr.bf16.mxu0 0
        %717 = vmatpush1.bf16.msra.mxu0 0
        %718 = vmatprep.subr.bf16.mxu0 0
        %719 = vmatpush1.bf16.msra.mxu0 0
        %720 = vmatprep.subr.bf16.mxu0 0
        %721 = vmatpush1.bf16.msra.mxu0 0
        %722 = vmatprep.subr.bf16.mxu0 0
        %723 = vmatpush1.bf16.msra.mxu0 0
        %724 = vmatprep.subr.bf16.mxu0 0
        %725 = vmatpush1.bf16.msra.mxu0 0
        %726 = vmatprep.subr.bf16.mxu0 0
        %727 = vmatpush1.bf16.msra.mxu0 0
        %728 = vmatprep.subr.bf16.mxu0 0
        %729 = vmatpush1.bf16.msra.mxu0 0
        %730 = vmatprep.subr.bf16.mxu0 0
        %731 = vmatpush1.bf16.msra.mxu0 0
        %732 = vmatprep.subr.bf16.mxu0 0
        %733 = vmatpush1.bf16.msra.mxu0 0
        %734 = vmatprep.mubr.bf16.mxu0 0
        %735 = vmatmul.mubr.bf16.gmra.mrb[0].mxu0 %v700
        %v736 = vpop.f32.mrb[0].mxu0
        %v737 = vadd.f32 %v685, %v736
        %v738 = vpop.f32.mrb[0].mxu0
        %v739 = vpop.f32.mrb[0].mxu0
        %v740 = vpop.f32.mrb[0].mxu0
        %741 = vdwg.mxu0
        %v742 = vpack.c.bf16 %v737, %v737
        %v743 = vld [vmem:[%s10] sm:$0x1]
        %v745 = vlaneseq
        %v746 = vshrl.u32 %v745, 7
        %v747 = vsub.s32 0, %v746
        %v748 = vrot.slane %v743, %v747
        %vm750 = vcmask 64512
        %v752 = vsel %vm750, %v608, 0
        %v755 = vsel %vm750, %v675, 0
        %757 = vmatprep.subr.bf16.mxu0 0
        %758 = vmatpush1.bf16.xpose.msra.mxu0 %v755
        %759 = vmatprep.subr.bf16.mxu0 0
        %760 = vmatpush1.bf16.xpose.msra.mxu0 0
        %761 = vmatprep.subr.bf16.mxu0 0
        %762 = vmatpush1.bf16.xpose.msra.mxu0 0
        %763 = vmatprep.subr.bf16.mxu0 0
        %764 = vmatpush1.bf16.xpose.msra.mxu0 0
        %765 = vmatprep.subr.bf16.mxu0 0
        %766 = vmatpush1.bf16.xpose.msra.mxu0 0
        %767 = vmatprep.subr.bf16.mxu0 0
        %768 = vmatpush1.bf16.xpose.msra.mxu0 0
        %769 = vmatprep.subr.bf16.mxu0 0
        %770 = vmatpush1.bf16.xpose.msra.mxu0 0
        %771 = vmatprep.subr.bf16.mxu0 0
        %772 = vmatpush1.bf16.xpose.msra.mxu0 0
        %773 = vmatprep.subr.bf16.mxu0 0
        %774 = vmatpush1.bf16.xpose.msra.mxu0 0
        %775 = vmatprep.subr.bf16.mxu0 0
        %776 = vmatpush1.bf16.xpose.msra.mxu0 0
        %777 = vmatprep.subr.bf16.mxu0 0
        %778 = vmatpush1.bf16.xpose.msra.mxu0 0
        %779 = vmatprep.subr.bf16.mxu0 0
        %780 = vmatpush1.bf16.xpose.msra.mxu0 0
        %781 = vmatprep.subr.bf16.mxu0 0
        %782 = vmatpush1.bf16.xpose.msra.mxu0 0
        %783 = vmatprep.subr.bf16.mxu0 0
        %784 = vmatpush1.bf16.xpose.msra.mxu0 0
        %785 = vmatprep.subr.bf16.mxu0 0
        %786 = vmatpush1.bf16.xpose.msra.mxu0 0
        %787 = vmatprep.subr.bf16.mxu0 0
        %788 = vmatpush1.bf16.xpose.msra.mxu0 0
        %789 = vmatprep.mubr.bf16.mxu0 0
        %790 = vmatmul.mubr.bf16.gmra.mrb[0].mxu0 %v752
        %v791 = vpop.f32.mrb[0].mxu0
        %v792 = vadd.f32 0.0, %v791
        %v793 = vpop.f32.mrb[0].mxu0
        %v794 = vpop.f32.mrb[0].mxu0
        %v795 = vpop.f32.mrb[0].mxu0
        %796 = vdwg.mxu0
        %v797 = vsel %vm750, %v792, -inf
        %798 = vmax.xlane.f32.xlu0 %v797
        %v799 = vpop.xlane.xlu0 %798
        %v800 = vsub.f32 %v792, %v799
        %v801 = vmul.f32 %v800, 1.442695
        %v802 = vpow.pop %v801
        %v803 = vsel %vm750, %v802, 0.0
        %804 = vadd.xlane.f32.xlu0 %v803
        %v805 = vpop.xlane.xlu0 %804
        %v806 = vrcp.pop %v805
        %v807 = vmul.f32 %v802, %v806
        %v808 = vpack.c.bf16 %v807, %v807
        %v810 = vsel %vm750, %v808, 0
        %vm812 = vcmask 1043456
        %v814 = vsel %vm812, %v742, 0
        %816 = vmatprep.subr.bf16.mxu0 0
        %817 = vmatpush1.bf16.msra.mxu0 %v814
        %818 = vmatprep.subr.bf16.mxu0 0
        %819 = vmatpush1.bf16.msra.mxu0 0
        %820 = vmatprep.subr.bf16.mxu0 0
        %821 = vmatpush1.bf16.msra.mxu0 0
        %822 = vmatprep.subr.bf16.mxu0 0
        %823 = vmatpush1.bf16.msra.mxu0 0
        %824 = vmatprep.subr.bf16.mxu0 0
        %825 = vmatpush1.bf16.msra.mxu0 0
        %826 = vmatprep.subr.bf16.mxu0 0
        %827 = vmatpush1.bf16.msra.mxu0 0
        %828 = vmatprep.subr.bf16.mxu0 0
        %829 = vmatpush1.bf16.msra.mxu0 0
        %830 = vmatprep.subr.bf16.mxu0 0
        %831 = vmatpush1.bf16.msra.mxu0 0
        %832 = vmatprep.subr.bf16.mxu0 0
        %833 = vmatpush1.bf16.msra.mxu0 0
        %834 = vmatprep.subr.bf16.mxu0 0
        %835 = vmatpush1.bf16.msra.mxu0 0
        %836 = vmatprep.subr.bf16.mxu0 0
        %837 = vmatpush1.bf16.msra.mxu0 0
        %838 = vmatprep.subr.bf16.mxu0 0
        %839 = vmatpush1.bf16.msra.mxu0 0
        %840 = vmatprep.subr.bf16.mxu0 0
        %841 = vmatpush1.bf16.msra.mxu0 0
        %842 = vmatprep.subr.bf16.mxu0 0
        %843 = vmatpush1.bf16.msra.mxu0 0
        %844 = vmatprep.subr.bf16.mxu0 0
        %845 = vmatpush1.bf16.msra.mxu0 0
        %846 = vmatprep.subr.bf16.mxu0 0
        %847 = vmatpush1.bf16.msra.mxu0 0
        %848 = vmatprep.mubr.bf16.mxu0 0
        %849 = vmatmul.mubr.bf16.gmra.mrb[0].mxu0 %v810
        %v850 = vpop.f32.mrb[0].mxu0
        %v851 = vadd.f32 0.0, %v850
        %v852 = vpop.f32.mrb[0].mxu0
        %v853 = vpop.f32.mrb[0].mxu0
        %v854 = vpop.f32.mrb[0].mxu0
        %855 = vdwg.mxu0
        %v856 = vpack.c.bf16 %v851, %v851
        %v857 = vld [vmem:[#allocation11] sm:$0xf]
        %v859 = vsel %vm750, %v856, 0
        %v862 = vsel %vm812, %v857, 0
        %864 = vmatprep.subr.bf16.mxu0 0
        %865 = vmatpush1.bf16.msra.mxu0 %v862
        %866 = vmatprep.subr.bf16.mxu0 0
        %867 = vmatpush1.bf16.msra.mxu0 0
        %868 = vmatprep.subr.bf16.mxu0 0
        %869 = vmatpush1.bf16.msra.mxu0 0
        %870 = vmatprep.subr.bf16.mxu0 0
        %871 = vmatpush1.bf16.msra.mxu0 0
        %872 = vmatprep.subr.bf16.mxu0 0
        %873 = vmatpush1.bf16.msra.mxu0 0
        %874 = vmatprep.subr.bf16.mxu0 0
        %875 = vmatpush1.bf16.msra.mxu0 0
        %876 = vmatprep.subr.bf16.mxu0 0
        %877 = vmatpush1.bf16.msra.mxu0 0
        %878 = vmatprep.subr.bf16.mxu0 0
        %879 = vmatpush1.bf16.msra.mxu0 0
        %880 = vmatprep.subr.bf16.mxu0 0
        %881 = vmatpush1.bf16.msra.mxu0 0
        %882 = vmatprep.subr.bf16.mxu0 0
        %883 = vmatpush1.bf16.msra.mxu0 0
        %884 = vmatprep.subr.bf16.mxu0 0
        %885 = vmatpush1.bf16.msra.mxu0 0
        %886 = vmatprep.subr.bf16.mxu0 0
        %887 = vmatpush1.bf16.msra.mxu0 0
        %888 = vmatprep.subr.bf16.mxu0 0
        %889 = vmatpush1.bf16.msra.mxu0 0
        %890 = vmatprep.subr.bf16.mxu0 0
        %891 = vmatpush1.bf16.msra.mxu0 0
        %892 = vmatprep.subr.bf16.mxu0 0
        %893 = vmatpush1.bf16.msra.mxu0 0
        %894 = vmatprep.subr.bf16.mxu0 0
        %895 = vmatpush1.bf16.msra.mxu0 0
        %896 = vmatprep.mubr.bf16.mxu0 0
        %897 = vmatmul.mubr.bf16.gmra.mrb[0].mxu0 %v859
        %v898 = vpop.f32.mrb[0].mxu0
        %v899 = vadd.f32 0.0, %v898
        %v900 = vpop.f32.mrb[0].mxu0
        %v901 = vpop.f32.mrb[0].mxu0
        %v902 = vpop.f32.mrb[0].mxu0
        %903 = vdwg.mxu0
        %v904 = vadd.f32 %v748, %v899
        %906 = vrot.lane.b32.xlu0 %v608, 120
        %v907 = vpop.permute.xlu0 %906
        %909 = vrot.lane.b32.xlu0 %v675, 120
        %v910 = vpop.permute.xlu0 %909
        %v912 = vsel %vm750, %v907, 0
        %v915 = vsel %vm750, %v910, 0
        %917 = vmatprep.subr.bf16.mxu0 0
        %918 = vmatpush1.bf16.xpose.msra.mxu0 %v915
        %919 = vmatprep.subr.bf16.mxu0 0
        %920 = vmatpush1.bf16.xpose.msra.mxu0 0
        %921 = vmatprep.subr.bf16.mxu0 0
        %922 = vmatpush1.bf16.xpose.msra.mxu0 0
        %923 = vmatprep.subr.bf16.mxu0 0
        %924 = vmatpush1.bf16.xpose.msra.mxu0 0
        %925 = vmatprep.subr.bf16.mxu0 0
        %926 = vmatpush1.bf16.xpose.msra.mxu0 0
        %927 = vmatprep.subr.bf16.mxu0 0
        %928 = vmatpush1.bf16.xpose.msra.mxu0 0
        %929 = vmatprep.subr.bf16.mxu0 0
        %930 = vmatpush1.bf16.xpose.msra.mxu0 0
        %931 = vmatprep.subr.bf16.mxu0 0
        %932 = vmatpush1.bf16.xpose.msra.mxu0 0
        %933 = vmatprep.subr.bf16.mxu0 0
        %934 = vmatpush1.bf16.xpose.msra.mxu0 0
        %935 = vmatprep.subr.bf16.mxu0 0
        %936 = vmatpush1.bf16.xpose.msra.mxu0 0
        %937 = vmatprep.subr.bf16.mxu0 0
        %938 = vmatpush1.bf16.xpose.msra.mxu0 0
        %939 = vmatprep.subr.bf16.mxu0 0
        %940 = vmatpush1.bf16.xpose.msra.mxu0 0
        %941 = vmatprep.subr.bf16.mxu0 0
        %942 = vmatpush1.bf16.xpose.msra.mxu0 0
        %943 = vmatprep.subr.bf16.mxu0 0
        %944 = vmatpush1.bf16.xpose.msra.mxu0 0
        %945 = vmatprep.subr.bf16.mxu0 0
        %946 = vmatpush1.bf16.xpose.msra.mxu0 0
        %947 = vmatprep.subr.bf16.mxu0 0
        %948 = vmatpush1.bf16.xpose.msra.mxu0 0
        %949 = vmatprep.mubr.bf16.mxu0 0
        %950 = vmatmul.mubr.bf16.gmra.mrb[0].mxu0 %v912
        %v951 = vpop.f32.mrb[0].mxu0
        %v952 = vadd.f32 0.0, %v951
        %v953 = vpop.f32.mrb[0].mxu0
        %v954 = vpop.f32.mrb[0].mxu0
        %v955 = vpop.f32.mrb[0].mxu0
        %956 = vdwg.mxu0
        %v957 = vsel %vm750, %v952, -inf
        %958 = vmax.xlane.f32.xlu0 %v957
        %v959 = vpop.xlane.xlu0 %958
        %v960 = vsub.f32 %v952, %v959
        %v961 = vmul.f32 %v960, 1.442695
        %v962 = vpow.pop %v961
        %v963 = vsel %vm750, %v962, 0.0
        %964 = vadd.xlane.f32.xlu0 %v963
        %v965 = vpop.xlane.xlu0 %964
        %v966 = vrcp.pop %v965
        %v967 = vmul.f32 %v962, %v966
        %v968 = vpack.c.bf16 %v967, %v967
        %970 = vrot.lane.b32.xlu0 %v742, 120
        %v971 = vpop.permute.xlu0 %970
        %v973 = vsel %vm750, %v968, 0
        %v976 = vsel %vm812, %v971, 0
        %978 = vmatprep.subr.bf16.mxu0 0
        %979 = vmatpush1.bf16.msra.mxu0 %v976
        %980 = vmatprep.subr.bf16.mxu0 0
        %981 = vmatpush1.bf16.msra.mxu0 0
        %982 = vmatprep.subr.bf16.mxu0 0
        %983 = vmatpush1.bf16.msra.mxu0 0
        %984 = vmatprep.subr.bf16.mxu0 0
        %985 = vmatpush1.bf16.msra.mxu0 0
        %986 = vmatprep.subr.bf16.mxu0 0
        %987 = vmatpush1.bf16.msra.mxu0 0
        %988 = vmatprep.subr.bf16.mxu0 0
        %989 = vmatpush1.bf16.msra.mxu0 0
        %990 = vmatprep.subr.bf16.mxu0 0
        %991 = vmatpush1.bf16.msra.mxu0 0
        %992 = vmatprep.subr.bf16.mxu0 0
        %993 = vmatpush1.bf16.msra.mxu0 0
        %994 = vmatprep.subr.bf16.mxu0 0
        %995 = vmatpush1.bf16.msra.mxu0 0
        %996 = vmatprep.subr.bf16.mxu0 0
        %997 = vmatpush1.bf16.msra.mxu0 0
        %998 = vmatprep.subr.bf16.mxu0 0
        %999 = vmatpush1.bf16.msra.mxu0 0
        %1000 = vmatprep.subr.bf16.mxu0 0
        %1001 = vmatpush1.bf16.msra.mxu0 0
        %1002 = vmatprep.subr.bf16.mxu0 0
        %1003 = vmatpush1.bf16.msra.mxu0 0
        %1004 = vmatprep.subr.bf16.mxu0 0
        %1005 = vmatpush1.bf16.msra.mxu0 0
        %1006 = vmatprep.subr.bf16.mxu0 0
        %1007 = vmatpush1.bf16.msra.mxu0 0
        %1008 = vmatprep.subr.bf16.mxu0 0
        %1009 = vmatpush1.bf16.msra.mxu0 0
        %1010 = vmatprep.mubr.bf16.mxu0 0
        %1011 = vmatmul.mubr.bf16.gmra.mrb[0].mxu0 %v973
        %v1012 = vpop.f32.mrb[0].mxu0
        %v1013 = vadd.f32 0.0, %v1012
        %v1014 = vpop.f32.mrb[0].mxu0
        %v1015 = vpop.f32.mrb[0].mxu0
        %v1016 = vpop.f32.mrb[0].mxu0
        %1017 = vdwg.mxu0
        %v1018 = vpack.c.bf16 %v1013, %v1013
        %v1019 = vld [vmem:[#allocation11 + $0x4] sm:$0xf]
        %v1021 = vsel %vm750, %v1018, 0
        %v1024 = vsel %vm812, %v1019, 0
        %1026 = vmatprep.subr.bf16.mxu0 0
        %1027 = vmatpush1.bf16.msra.mxu0 %v1024
        %1028 = vmatprep.subr.bf16.mxu0 0
        %1029 = vmatpush1.bf16.msra.mxu0 0
        %1030 = vmatprep.subr.bf16.mxu0 0
        %1031 = vmatpush1.bf16.msra.mxu0 0
        %1032 = vmatprep.subr.bf16.mxu0 0
        %1033 = vmatpush1.bf16.msra.mxu0 0
        %1034 = vmatprep.subr.bf16.mxu0 0
        %1035 = vmatpush1.bf16.msra.mxu0 0
        %1036 = vmatprep.subr.bf16.mxu0 0
        %1037 = vmatpush1.bf16.msra.mxu0 0
        %1038 = vmatprep.subr.bf16.mxu0 0
        %1039 = vmatpush1.bf16.msra.mxu0 0
        %1040 = vmatprep.subr.bf16.mxu0 0
        %1041 = vmatpush1.bf16.msra.mxu0 0
        %1042 = vmatprep.subr.bf16.mxu0 0
        %1043 = vmatpush1.bf16.msra.mxu0 0
        %1044 = vmatprep.subr.bf16.mxu0 0
        %1045 = vmatpush1.bf16.msra.mxu0 0
        %1046 = vmatprep.subr.bf16.mxu0 0
        %1047 = vmatpush1.bf16.msra.mxu0 0
        %1048 = vmatprep.subr.bf16.mxu0 0
        %1049 = vmatpush1.bf16.msra.mxu0 0
        %1050 = vmatprep.subr.bf16.mxu0 0
        %1051 = vmatpush1.bf16.msra.mxu0 0
        %1052 = vmatprep.subr.bf16.mxu0 0
        %1053 = vmatpush1.bf16.msra.mxu0 0
        %1054 = vmatprep.subr.bf16.mxu0 0
        %1055 = vmatpush1.bf16.msra.mxu0 0
        %1056 = vmatprep.subr.bf16.mxu0 0
        %1057 = vmatpush1.bf16.msra.mxu0 0
        %1058 = vmatprep.mubr.bf16.mxu0 0
        %1059 = vmatmul.mubr.bf16.gmra.mrb[0].mxu0 %v1021
        %v1060 = vpop.f32.mrb[0].mxu0
        %v1061 = vadd.f32 0.0, %v1060
        %v1062 = vpop.f32.mrb[0].mxu0
        %v1063 = vpop.f32.mrb[0].mxu0
        %v1064 = vpop.f32.mrb[0].mxu0
        %1065 = vdwg.mxu0
        %v1066 = vadd.f32 %v904, %v1061
        %1067 = vrot.lane.b32.xlu0 %v608, 112
        %v1068 = vpop.permute.xlu0 %1067
        %1069 = vrot.lane.b32.xlu0 %v675, 112
        %v1070 = vpop.permute.xlu0 %1069
        %v1072 = vsel %vm750, %v1068, 0
        %v1075 = vsel %vm750, %v1070, 0
        %1077 = vmatprep.subr.bf16.mxu0 0
        %1078 = vmatpush1.bf16.xpose.msra.mxu0 %v1075
        %1079 = vmatprep.subr.bf16.mxu0 0
        %1080 = vmatpush1.bf16.xpose.msra.mxu0 0
        %1081 = vmatprep.subr.bf16.mxu0 0
        %1082 = vmatpush1.bf16.xpose.msra.mxu0 0
        %1083 = vmatprep.subr.bf16.mxu0 0
        %1084 = vmatpush1.bf16.xpose.msra.mxu0 0
        %1085 = vmatprep.subr.bf16.mxu0 0
        %1086 = vmatpush1.bf16.xpose.msra.mxu0 0
        %1087 = vmatprep.subr.bf16.mxu0 0
        %1088 = vmatpush1.bf16.xpose.msra.mxu0 0
        %1089 = vmatprep.subr.bf16.mxu0 0
        %1090 = vmatpush1.bf16.xpose.msra.mxu0 0
        %1091 = vmatprep.subr.bf16.mxu0 0
        %1092 = vmatpush1.bf16.xpose.msra.mxu0 0
        %1093 = vmatprep.subr.bf16.mxu0 0
        %1094 = vmatpush1.bf16.xpose.msra.mxu0 0
        %1095 = vmatprep.subr.bf16.mxu0 0
        %1096 = vmatpush1.bf16.xpose.msra.mxu0 0
        %1097 = vmatprep.subr.bf16.mxu0 0
        %1098 = vmatpush1.bf16.xpose.msra.mxu0 0
        %1099 = vmatprep.subr.bf16.mxu0 0
        %1100 = vmatpush1.bf16.xpose.msra.mxu0 0
        %1101 = vmatprep.subr.bf16.mxu0 0
        %1102 = vmatpush1.bf16.xpose.msra.mxu0 0
        %1103 = vmatprep.subr.bf16.mxu0 0
        %1104 = vmatpush1.bf16.xpose.msra.mxu0 0
        %1105 = vmatprep.subr.bf16.mxu0 0
        %1106 = vmatpush1.bf16.xpose.msra.mxu0 0
        %1107 = vmatprep.subr.bf16.mxu0 0
        %1108 = vmatpush1.bf16.xpose.msra.mxu0 0
        %1109 = vmatprep.mubr.bf16.mxu0 0
        %1110 = vmatmul.mubr.bf16.gmra.mrb[0].mxu0 %v1072
        %v1111 = vpop.f32.mrb[0].mxu0
        %v1112 = vadd.f32 0.0, %v1111
        %v1113 = vpop.f32.mrb[0].mxu0
        %v1114 = vpop.f32.mrb[0].mxu0
        %v1115 = vpop.f32.mrb[0].mxu0
        %1116 = vdwg.mxu0
        %v1117 = vsel %vm750, %v1112, -inf
        %1118 = vmax.xlane.f32.xlu0 %v1117
        %v1119 = vpop.xlane.xlu0 %1118
        %v1120 = vsub.f32 %v1112, %v1119
        %v1121 = vmul.f32 %v1120, 1.442695
        %v1122 = vpow.pop %v1121
        %v1123 = vsel %vm750, %v1122, 0.0
        %1124 = vadd.xlane.f32.xlu0 %v1123
        %v1125 = vpop.xlane.xlu0 %1124
        %v1126 = vrcp.pop %v1125
        %v1127 = vmul.f32 %v1122, %v1126
        %v1128 = vpack.c.bf16 %v1127, %v1127
        %1129 = vrot.lane.b32.xlu0 %v742, 112
        %v1130 = vpop.permute.xlu0 %1129
        %v1132 = vsel %vm750, %v1128, 0
        %v1135 = vsel %vm812, %v1130, 0
        %1137 = vmatprep.subr.bf16.mxu0 0
        %1138 = vmatpush1.bf16.msra.mxu0 %v1135
        %1139 = vmatprep.subr.bf16.mxu0 0
        %1140 = vmatpush1.bf16.msra.mxu0 0
        %1141 = vmatprep.subr.bf16.mxu0 0
        %1142 = vmatpush1.bf16.msra.mxu0 0
        %1143 = vmatprep.subr.bf16.mxu0 0
        %1144 = vmatpush1.bf16.msra.mxu0 0
        %1145 = vmatprep.subr.bf16.mxu0 0
        %1146 = vmatpush1.bf16.msra.mxu0 0
        %1147 = vmatprep.subr.bf16.mxu0 0
        %1148 = vmatpush1.bf16.msra.mxu0 0
        %1149 = vmatprep.subr.bf16.mxu0 0
        %1150 = vmatpush1.bf16.msra.mxu0 0
        %1151 = vmatprep.subr.bf16.mxu0 0
        %1152 = vmatpush1.bf16.msra.mxu0 0
        %1153 = vmatprep.subr.bf16.mxu0 0
        %1154 = vmatpush1.bf16.msra.mxu0 0
        %1155 = vmatprep.subr.bf16.mxu0 0
        %1156 = vmatpush1.bf16.msra.mxu0 0
        %1157 = vmatprep.subr.bf16.mxu0 0
        %1158 = vmatpush1.bf16.msra.mxu0 0
        %1159 = vmatprep.subr.bf16.mxu0 0
        %1160 = vmatpush1.bf16.msra.mxu0 0
        %1161 = vmatprep.subr.bf16.mxu0 0
        %1162 = vmatpush1.bf16.msra.mxu0 0
        %1163 = vmatprep.subr.bf16.mxu0 0
        %1164 = vmatpush1.bf16.msra.mxu0 0
        %1165 = vmatprep.subr.bf16.mxu0 0
        %1166 = vmatpush1.bf16.msra.mxu0 0
        %1167 = vmatprep.subr.bf16.mxu0 0
        %1168 = vmatpush1.bf16.msra.mxu0 0
        %1169 = vmatprep.mubr.bf16.mxu0 0
        %1170 = vmatmul.mubr.bf16.gmra.mrb[0].mxu0 %v1132
        %v1171 = vpop.f32.mrb[0].mxu0
        %v1172 = vadd.f32 0.0, %v1171
        %v1173 = vpop.f32.mrb[0].mxu0
        %v1174 = vpop.f32.mrb[0].mxu0
        %v1175 = vpop.f32.mrb[0].mxu0
        %1176 = vdwg.mxu0
        %v1177 = vpack.c.bf16 %v1172, %v1172
        %v1178 = vld [vmem:[#allocation11 + $0x8] sm:$0xf]
        %v1180 = vsel %vm750, %v1177, 0
        %v1183 = vsel %vm812, %v1178, 0
        %1185 = vmatprep.subr.bf16.mxu0 0
        %1186 = vmatpush1.bf16.msra.mxu0 %v1183
        %1187 = vmatprep.subr.bf16.mxu0 0
        %1188 = vmatpush1.bf16.msra.mxu0 0
        %1189 = vmatprep.subr.bf16.mxu0 0
        %1190 = vmatpush1.bf16.msra.mxu0 0
        %1191 = vmatprep.subr.bf16.mxu0 0
        %1192 = vmatpush1.bf16.msra.mxu0 0
        %1193 = vmatprep.subr.bf16.mxu0 0
        %1194 = vmatpush1.bf16.msra.mxu0 0
        %1195 = vmatprep.subr.bf16.mxu0 0
        %1196 = vmatpush1.bf16.msra.mxu0 0
        %1197 = vmatprep.subr.bf16.mxu0 0
        %1198 = vmatpush1.bf16.msra.mxu0 0
        %1199 = vmatprep.subr.bf16.mxu0 0
        %1200 = vmatpush1.bf16.msra.mxu0 0
        %1201 = vmatprep.subr.bf16.mxu0 0
        %1202 = vmatpush1.bf16.msra.mxu0 0
        %1203 = vmatprep.subr.bf16.mxu0 0
        %1204 = vmatpush1.bf16.msra.mxu0 0
        %1205 = vmatprep.subr.bf16.mxu0 0
        %1206 = vmatpush1.bf16.msra.mxu0 0
        %1207 = vmatprep.subr.bf16.mxu0 0
        %1208 = vmatpush1.bf16.msra.mxu0 0
        %1209 = vmatprep.subr.bf16.mxu0 0
        %1210 = vmatpush1.bf16.msra.mxu0 0
        %1211 = vmatprep.subr.bf16.mxu0 0
        %1212 = vmatpush1.bf16.msra.mxu0 0
        %1213 = vmatprep.subr.bf16.mxu0 0
        %1214 = vmatpush1.bf16.msra.mxu0 0
        %1215 = vmatprep.subr.bf16.mxu0 0
        %1216 = vmatpush1.bf16.msra.mxu0 0
        %1217 = vmatprep.mubr.bf16.mxu0 0
        %1218 = vmatmul.mubr.bf16.gmra.mrb[0].mxu0 %v1180
        %v1219 = vpop.f32.mrb[0].mxu0
        %v1220 = vadd.f32 0.0, %v1219
        %v1221 = vpop.f32.mrb[0].mxu0
        %v1222 = vpop.f32.mrb[0].mxu0
        %v1223 = vpop.f32.mrb[0].mxu0
        %1224 = vdwg.mxu0
        %v1225 = vadd.f32 %v1066, %v1220
        %1226 = vrot.lane.b32.xlu0 %v608, 104
        %v1227 = vpop.permute.xlu0 %1226
        %1228 = vrot.lane.b32.xlu0 %v675, 104
        %v1229 = vpop.permute.xlu0 %1228
        %v1231 = vsel %vm750, %v1227, 0
        %v1234 = vsel %vm750, %v1229, 0
        %1236 = vmatprep.subr.bf16.mxu0 0
        %1237 = vmatpush1.bf16.xpose.msra.mxu0 %v1234
        %1238 = vmatprep.subr.bf16.mxu0 0
        %1239 = vmatpush1.bf16.xpose.msra.mxu0 0
        %1240 = vmatprep.subr.bf16.mxu0 0
        %1241 = vmatpush1.bf16.xpose.msra.mxu0 0
        %1242 = vmatprep.subr.bf16.mxu0 0
        %1243 = vmatpush1.bf16.xpose.msra.mxu0 0
        %1244 = vmatprep.subr.bf16.mxu0 0
        %1245 = vmatpush1.bf16.xpose.msra.mxu0 0
        %1246 = vmatprep.subr.bf16.mxu0 0
        %1247 = vmatpush1.bf16.xpose.msra.mxu0 0
        %1248 = vmatprep.subr.bf16.mxu0 0
        %1249 = vmatpush1.bf16.xpose.msra.mxu0 0
        %1250 = vmatprep.subr.bf16.mxu0 0
        %1251 = vmatpush1.bf16.xpose.msra.mxu0 0
        %1252 = vmatprep.subr.bf16.mxu0 0
        %1253 = vmatpush1.bf16.xpose.msra.mxu0 0
        %1254 = vmatprep.subr.bf16.mxu0 0
        %1255 = vmatpush1.bf16.xpose.msra.mxu0 0
        %1256 = vmatprep.subr.bf16.mxu0 0
        %1257 = vmatpush1.bf16.xpose.msra.mxu0 0
        %1258 = vmatprep.subr.bf16.mxu0 0
        %1259 = vmatpush1.bf16.xpose.msra.mxu0 0
        %1260 = vmatprep.subr.bf16.mxu0 0
        %1261 = vmatpush1.bf16.xpose.msra.mxu0 0
        %1262 = vmatprep.subr.bf16.mxu0 0
        %1263 = vmatpush1.bf16.xpose.msra.mxu0 0
        %1264 = vmatprep.subr.bf16.mxu0 0
        %1265 = vmatpush1.bf16.xpose.msra.mxu0 0
        %1266 = vmatprep.subr.bf16.mxu0 0
        %1267 = vmatpush1.bf16.xpose.msra.mxu0 0
        %1268 = vmatprep.mubr.bf16.mxu0 0
        %1269 = vmatmul.mubr.bf16.gmra.mrb[0].mxu0 %v1231
        %v1270 = vpop.f32.mrb[0].mxu0
        %v1271 = vadd.f32 0.0, %v1270
        %v1272 = vpop.f32.mrb[0].mxu0
        %v1273 = vpop.f32.mrb[0].mxu0
        %v1274 = vpop.f32.mrb[0].mxu0
        %1275 = vdwg.mxu0
        %v1276 = vsel %vm750, %v1271, -inf
        %1277 = vmax.xlane.f32.xlu0 %v1276
        %v1278 = vpop.xlane.xlu0 %1277
        %v1279 = vsub.f32 %v1271, %v1278
        %v1280 = vmul.f32 %v1279, 1.442695
        %v1281 = vpow.pop %v1280
        %v1282 = vsel %vm750, %v1281, 0.0
        %1283 = vadd.xlane.f32.xlu0 %v1282
        %v1284 = vpop.xlane.xlu0 %1283
        %v1285 = vrcp.pop %v1284
        %v1286 = vmul.f32 %v1281, %v1285
        %v1287 = vpack.c.bf16 %v1286, %v1286
        %1288 = vrot.lane.b32.xlu0 %v742, 104
        %v1289 = vpop.permute.xlu0 %1288
        %v1291 = vsel %vm750, %v1287, 0
        %v1294 = vsel %vm812, %v1289, 0
        %1296 = vmatprep.subr.bf16.mxu0 0
        %1297 = vmatpush1.bf16.msra.mxu0 %v1294
        %1298 = vmatprep.subr.bf16.mxu0 0
        %1299 = vmatpush1.bf16.msra.mxu0 0
        %1300 = vmatprep.subr.bf16.mxu0 0
        %1301 = vmatpush1.bf16.msra.mxu0 0
        %1302 = vmatprep.subr.bf16.mxu0 0
        %1303 = vmatpush1.bf16.msra.mxu0 0
        %1304 = vmatprep.subr.bf16.mxu0 0
        %1305 = vmatpush1.bf16.msra.mxu0 0
        %1306 = vmatprep.subr.bf16.mxu0 0
        %1307 = vmatpush1.bf16.msra.mxu0 0
        %1308 = vmatprep.subr.bf16.mxu0 0
        %1309 = vmatpush1.bf16.msra.mxu0 0
        %1310 = vmatprep.subr.bf16.mxu0 0
        %1311 = vmatpush1.bf16.msra.mxu0 0
        %1312 = vmatprep.subr.bf16.mxu0 0
        %1313 = vmatpush1.bf16.msra.mxu0 0
        %1314 = vmatprep.subr.bf16.mxu0 0
        %1315 = vmatpush1.bf16.msra.mxu0 0
        %1316 = vmatprep.subr.bf16.mxu0 0
        %1317 = vmatpush1.bf16.msra.mxu0 0
        %1318 = vmatprep.subr.bf16.mxu0 0
        %1319 = vmatpush1.bf16.msra.mxu0 0
        %1320 = vmatprep.subr.bf16.mxu0 0
        %1321 = vmatpush1.bf16.msra.mxu0 0
        %1322 = vmatprep.subr.bf16.mxu0 0
        %1323 = vmatpush1.bf16.msra.mxu0 0
        %1324 = vmatprep.subr.bf16.mxu0 0
        %1325 = vmatpush1.bf16.msra.mxu0 0
        %1326 = vmatprep.subr.bf16.mxu0 0
        %1327 = vmatpush1.bf16.msra.mxu0 0
        %1328 = vmatprep.mubr.bf16.mxu0 0
        %1329 = vmatmul.mubr.bf16.gmra.mrb[0].mxu0 %v1291
        %v1330 = vpop.f32.mrb[0].mxu0
        %v1331 = vadd.f32 0.0, %v1330
        %v1332 = vpop.f32.mrb[0].mxu0
        %v1333 = vpop.f32.mrb[0].mxu0
        %v1334 = vpop.f32.mrb[0].mxu0
        %1335 = vdwg.mxu0
        %v1336 = vpack.c.bf16 %v1331, %v1331
        %v1337 = vld [vmem:[#allocation11 + $0xc] sm:$0xf]
        %v1339 = vsel %vm750, %v1336, 0
        %v1342 = vsel %vm812, %v1337, 0
        %1344 = vmatprep.subr.bf16.mxu0 0
        %1345 = vmatpush1.bf16.msra.mxu0 %v1342
        %1346 = vmatprep.subr.bf16.mxu0 0
        %1347 = vmatpush1.bf16.msra.mxu0 0
        %1348 = vmatprep.subr.bf16.mxu0 0
        %1349 = vmatpush1.bf16.msra.mxu0 0
        %1350 = vmatprep.subr.bf16.mxu0 0
        %1351 = vmatpush1.bf16.msra.mxu0 0
        %1352 = vmatprep.subr.bf16.mxu0 0
        %1353 = vmatpush1.bf16.msra.mxu0 0
        %1354 = vmatprep.subr.bf16.mxu0 0
        %1355 = vmatpush1.bf16.msra.mxu0 0
        %1356 = vmatprep.subr.bf16.mxu0 0
        %1357 = vmatpush1.bf16.msra.mxu0 0
        %1358 = vmatprep.subr.bf16.mxu0 0
        %1359 = vmatpush1.bf16.msra.mxu0 0
        %1360 = vmatprep.subr.bf16.mxu0 0
        %1361 = vmatpush1.bf16.msra.mxu0 0
        %1362 = vmatprep.subr.bf16.mxu0 0
        %1363 = vmatpush1.bf16.msra.mxu0 0
        %1364 = vmatprep.subr.bf16.mxu0 0
        %1365 = vmatpush1.bf16.msra.mxu0 0
        %1366 = vmatprep.subr.bf16.mxu0 0
        %1367 = vmatpush1.bf16.msra.mxu0 0
        %1368 = vmatprep.subr.bf16.mxu0 0
        %1369 = vmatpush1.bf16.msra.mxu0 0
        %1370 = vmatprep.subr.bf16.mxu0 0
        %1371 = vmatpush1.bf16.msra.mxu0 0
        %1372 = vmatprep.subr.bf16.mxu0 0
        %1373 = vmatpush1.bf16.msra.mxu0 0
        %1374 = vmatprep.subr.bf16.mxu0 0
        %1375 = vmatpush1.bf16.msra.mxu0 0
        %1376 = vmatprep.mubr.bf16.mxu0 0
        %1377 = vmatmul.mubr.bf16.gmra.mrb[0].mxu0 %v1339
        %v1378 = vpop.f32.mrb[0].mxu0
        %v1379 = vadd.f32 0.0, %v1378
        %v1380 = vpop.f32.mrb[0].mxu0
        %v1381 = vpop.f32.mrb[0].mxu0
        %v1382 = vpop.f32.mrb[0].mxu0
        %1383 = vdwg.mxu0
        %v1384 = vadd.f32 %v1225, %v1379
        %1385 = vst.msk [vmem:[%s533] sm:$0xff] %vm564, %v1384
        %s1386 = sand.u32 %s303, 1
        %s1387 = scalar_lea.sflag [#allocation4], %s1386
        %s1388 = sand.u32 %s303, 1
        %s1389 = smul.addr %s1388, 8
        %s1390 = scalar_lea.vmem [#allocation13], %s1389
        // Predicated region
        $region89: #{tpu_custom_call.1} parent=63 // pred_check
          %p1391 = pneg %p313
        $region90: #{tpu_custom_call.1} parent=63 // pred_check_branch
          %1393 = sbr.rel (%p1391) target = $region92
        $region91: #{tpu_custom_call.1} parent=63 // pred_region
          %s1395 = ssub.s32 128, 128
          %1396 = vsyncadd %s1387, %s1395
          %s1397 = sadd.s32 %s38, %s37
          %s1398 = smul.addr %s1397, 128
          %s1399 = scalar_lea.hbm %s11, %s1398
          %s1401 = sshll.u32 %s1390, 4
          %s1402 = int_to_ptr.vmem [resolvable:$true] %s1401
          %1404 = dma.vmem_to_hbm [thread:$0]  %s1402, 128, %s1399, %s1387
        $region92: #{tpu_custom_call.1} parent=63 // pred_fallthru
          _
      $region64: #{tpu_custom_call.1} parent=5 // pred_fallthru
        _
      %p1405 = scmp.le.s32.totalorder 2, %s28
      // Predicated region
      $region93: #{tpu_custom_call.1} parent=5 // pred_check
        %p1406 = pneg %p1405
      $region94: #{tpu_custom_call.1} parent=5 // pred_check_branch
        %1408 = sbr.rel (%p1406) target = $region96
      $region95: #{tpu_custom_call.1} parent=5 // pred_region
        %s1409 = ssub.s32 %s28, 2
        // Predicated region
        $region97: #{tpu_custom_call.1} parent=95 // pred_check
          %p1410 = pneg %p319
        $region98: #{tpu_custom_call.1} parent=95 // pred_check_branch
          %1412 = sbr.rel (%p1410) target = $region100
        $region99: #{tpu_custom_call.1} parent=95 // pred_region
          %s1413 = sand.u32 %s304, 1
          %s1414 = scalar_lea.sflag [#allocation4], %s1413
          %s1415 = sand.u32 %s304, 1
          %s1416 = smul.addr %s1415, 8
          %s1417 = scalar_lea.vmem [#allocation13], %s1416
          %1418 = dma.done %s1414, 128
        $region100: #{tpu_custom_call.1} parent=95 // pred_fallthru
          _
      $region96: #{tpu_custom_call.1} parent=5 // pred_fallthru
        _
    $region6: #{tpu_custom_call.1} parent=1 // loop_footer
      %s32 = sadd.s32 1, %s28
    $region7: #{tpu_custom_call.1} parent=1 // loop_footer_branch
      %27 = sbr.rel target = $region3
    $region8: #{tpu_custom_call.1} parent=1 // loop_exit
      _
    %1419 = vsyncpa [#allocation3], 1
    %s1420 = scalar_lea.sflag [#allocation3], 1
    %1421 = vsyncpa %s1420, 1
    %1422 = vsyncpa [#allocation6], 1
    %s1423 = scalar_lea.sflag [#allocation6], 1
    %1424 = vsyncpa %s1423, 1
    %1425 = vsyncpa [#allocation9], 1
    %1426 = vsyncpa [#allocation12], 1
    %1427 = vsyncpa [#allocation4], 1
    %s1428 = scalar_lea.sflag [#allocation4], 1
    %1429 = vsyncpa %s1428, 1

</llo_original>
